<compile_context>
chip_gen: v6e
topology: v6e:2x2x1
jax: 0.10.0
libtpu: 0.0.40
codegen_flags: <defaults>
</compile_context>

<pallas_src>
import functools

import jax
import jax.numpy as jnp
from jax.experimental import pallas as pl
from jax.experimental.pallas import tpu as pltpu


def _actor_kernel(x_ref,      # (T*Bp, D)   time-major, batch-padded input
                  wih_ref,    # (D, 3H)     GRU input weights, gate cols [r|z|n]
                  whh_ref,    # (H, 3H)     GRU hidden weights, gate cols [r|z|n]
                  bias_ref,   # (1, 3H)     [bih_r+bhh_r | bih_z+bhh_z | bih_n]
                  bhn_ref,    # (1, H)      bhh_n (kept separate: inside r*(.))
                  w1_ref,     # (H, H)      actor[0] weight (transposed)
                  b1_ref,     # (1, H)
                  w2_ref,     # (1, H)      actor[2] weight (row vector)
                  b2_ref,     # (1, 1)
                  mu_ref,     # (T*Bp, 1)   output column
                  gi_ref,     # (T*Bp, 3H)  VMEM scratch: fused input projection
                  hall_ref,   # (T*Bp, H)   VMEM scratch: all hidden states
                  *, batch_pad):
    Bp = batch_pad
    TBp = x_ref.shape[0]
    T = TBp // Bp
    H = whh_ref.shape[0]

    # ---- Hoisted fused input projection (one MXU push), biases folded in.
    gi_ref[...] = (jnp.dot(x_ref[...], wih_ref[...],
                           preferred_element_type=jnp.float32)
                   + bias_ref[...])

    # Loop-invariant loads hoisted out of the recurrence.
    whh = whh_ref[...]                       # (H, 3H)
    bhn = bhn_ref[...]                       # (1, H)

    def gru_step(t, h):
        row = pl.multiple_of(t * Bp, Bp)
        gi = gi_ref[pl.ds(row, Bp), :]                          # (Bp, 3H)
        # Single fused recurrent matmul per step (critical path).
        gh = jnp.dot(h, whh, preferred_element_type=jnp.float32)  # (Bp, 3H)
        # One sigmoid over the concatenated r|z slab, then static lane slices.
        rz = jax.nn.sigmoid(gi[:, :2 * H] + gh[:, :2 * H])      # (Bp, 2H)
        r = rz[:, :H]
        z = rz[:, H:]
        # PyTorch GRU: n = tanh(gi_n + r * (gh_n + b_hh_n))
        n = jnp.tanh(gi[:, 2 * H:] + r * (gh[:, 2 * H:] + bhn))
        h_new = (1.0 - z) * n + z * h
        hall_ref[pl.ds(row, Bp), :] = h_new                     # full-tile store
        return h_new

    h0 = jnp.zeros((Bp, H), dtype=jnp.float32)
    jax.lax.fori_loop(0, T, gru_step, h0, unroll=True)

    # ---- Actor head: Linear -> ReLU -> Linear over all (t, b) hidden states.
    hall = hall_ref[...]                                        # (T*Bp, H)
    a1 = jnp.maximum(
        jnp.dot(hall, w1_ref[...], preferred_element_type=jnp.float32)
        + b1_ref[...],
        0.0)
    # H -> 1 projection: VPU broadcast-multiply + lane reduction, keepdims so
    # the result stays sublane-oriented (no in-kernel relayout).
    mu_ref[...] = jnp.sum(a1 * w2_ref[...], axis=1, keepdims=True) + b2_ref[...]


def actor_forward(x, params):
    """x: (B, T, D) float32 (batch_first, like PyTorch). Returns (mu, std), each (B, T)."""
    B, T, D = x.shape
    H = params["w_hh"].shape[1]
    Bp = ((B + 7) // 8) * 8                    # pad batch to full sublane tiles

    # Time-major transpose + zero-pad batch + flatten, all outside the kernel.
    x_tm = jnp.transpose(x, (1, 0, 2)).astype(jnp.float32)       # (T, B, D)
    x_tm = jnp.pad(x_tm, ((0, 0), (0, Bp - B), (0, 0)))          # (T, Bp, D)
    x_flat = x_tm.reshape(T * Bp, D)

    # Gate-concatenated weights, pre-transposed to (in, 3H) with [r|z|n] cols.
    wih = params["w_ih"].T.astype(jnp.float32)                   # (D, 3H)
    whh = params["w_hh"].T.astype(jnp.float32)                   # (H, 3H)
    bih = params["b_ih"]
    bhh = params["b_hh"]
    # Fold biases: r and z gates see bih+bhh; the n gate's input bias is bih_n,
    # while bhh_n must stay inside r * (.) and is passed separately.
    bias = jnp.concatenate([bih[:2 * H] + bhh[:2 * H],
                            bih[2 * H:]]).reshape(1, 3 * H).astype(jnp.float32)
    bhn = bhh[2 * H:].reshape(1, H).astype(jnp.float32)

    w1 = params["w1"].T.astype(jnp.float32)                      # (H, H)
    b1 = params["b1"].reshape(1, H).astype(jnp.float32)
    w2 = params["w2"].reshape(1, H).astype(jnp.float32)
    b2 = params["b2"].reshape(1, 1).astype(jnp.float32)

    vmem = pl.BlockSpec(memory_space=pltpu.MemorySpace.VMEM)
    kernel = functools.partial(_actor_kernel, batch_pad=Bp)
    mu_col = pl.pallas_call(
        kernel,
        out_shape=jax.ShapeDtypeStruct((T * Bp, 1), jnp.float32),
        in_specs=[vmem] * 9,
        out_specs=vmem,
        scratch_shapes=[pltpu.VMEM((T * Bp, 3 * H), jnp.float32),  # fused GI
                        pltpu.VMEM((T * Bp, H), jnp.float32)],     # hidden states
    )(x_flat, wih, whh, bias, bhn, w1, b1, w2, b2)

    mu = mu_col.reshape(T, Bp)[:, :B].T                          # (B, T)
    # NOTE: matches PyTorch's log_std.exp().expand_as(mu); requires
    # num_outputs == seq_len (or 1), same as the original module's usage here.
    std = jnp.broadcast_to(jnp.exp(params["log_std"]), mu.shape)
    return mu, std


def make_params(key, num_inputs, num_outputs, hidden, std=0.0):
    """Deterministic synthetic parameters with PyTorch-convention shapes."""
    ks = jax.random.split(key, 8)
    bound = 1.0 / jnp.sqrt(hidden)
    p = {
        # GRU (default PyTorch init: uniform(-1/sqrt(H), 1/sqrt(H)))
        "w_ih": jax.random.uniform(ks[0], (3 * hidden, num_inputs), jnp.float32, -bound, bound),
        "w_hh": jax.random.uniform(ks[1], (3 * hidden, hidden), jnp.float32, -bound, bound),
        "b_ih": jax.random.uniform(ks[2], (3 * hidden,), jnp.float32, -bound, bound),
        "b_hh": jax.random.uniform(ks[3], (3 * hidden,), jnp.float32, -bound, bound),
        # Linear layers: init_weights -> N(0, 0.1) weight, 0.1 bias
        "w1": 0.1 * jax.random.normal(ks[4], (hidden, hidden), jnp.float32),
        "b1": jnp.full((hidden,), 0.1, jnp.float32),
        "w2": 0.1 * jax.random.normal(ks[5], (1, hidden), jnp.float32),
        "b2": jnp.full((1,), 0.1, jnp.float32),
        # log_std = ones(1, num_outputs) * std
        "log_std": jnp.full((1, num_outputs), std, jnp.float32),
    }
    return p


def ref_forward(x, params):
    """Pure-JAX reference mirroring torch.nn.GRU + the actor head."""
    B, T, D = x.shape
    H = params["w_hh"].shape[1]
    h = jnp.zeros((B, H), jnp.float32)
    hs = []
    for t in range(T):
        xt = x[:, t, :]
        gi = xt @ params["w_ih"].T + params["b_ih"]
        gh = h @ params["w_hh"].T + params["b_hh"]
        r = jax.nn.sigmoid(gi[:, :H] + gh[:, :H])
        z = jax.nn.sigmoid(gi[:, H:2 * H] + gh[:, H:2 * H])
        n = jnp.tanh(gi[:, 2 * H:] + r * gh[:, 2 * H:])
        h = (1.0 - z) * n + z * h
        hs.append(h)
    hall = jnp.stack(hs, axis=1)                                 # (B, T, H)
    a1 = jax.nn.relu(hall @ params["w1"].T + params["b1"])
    mu = (a1 @ params["w2"].T + params["b2"])[..., 0]            # (B, T)
    std = jnp.broadcast_to(jnp.exp(params["log_std"]), mu.shape)
    return mu, std


if __name__ == "__main__":
    # Small shapes consistent with the module: batch=4, seq=8, num_inputs=16, hidden=32
    B, T, D, H = 4, 8, 16, 32
    num_outputs = T  # log_std (1, num_outputs) must expand_as mu (B, T)

    key = jax.random.PRNGKey(0)
    kx, kp = jax.random.split(key)
    x = jax.random.normal(kx, (B, T, D), jnp.float32)
    params = make_params(kp, D, num_outputs, H, std=0.0)

    mu, std = actor_forward(x, params)
    mu = jax.block_until_ready(mu)
    std = jax.block_until_ready(std)

    mu_ref, std_ref = ref_forward(x, params)
    assert mu.shape == (B, T) and std.shape == (B, T)
    # Tolerance accounts for TPU default matmul precision (single-pass bf16).
    assert jnp.allclose(mu, mu_ref, atol=1e-3, rtol=1e-3), (
        f"max abs err {jnp.max(jnp.abs(mu - mu_ref))}")
    assert jnp.allclose(std, std_ref, atol=1e-6, rtol=1e-6)

    print("KERNEL_OK")
</pallas_src>

<mosaic_0001>
module attributes {stable_mosaic.version = 11 : i64} {
  func.func @_actor_kernel(%arg0: memref<64x16xf32, #tpu.memory_space<vmem>>, %arg1: memref<16x96xf32, #tpu.memory_space<vmem>>, %arg2: memref<32x96xf32, #tpu.memory_space<vmem>>, %arg3: memref<1x96xf32, #tpu.memory_space<vmem>>, %arg4: memref<1x32xf32, #tpu.memory_space<vmem>>, %arg5: memref<32x32xf32, #tpu.memory_space<vmem>>, %arg6: memref<1x32xf32, #tpu.memory_space<vmem>>, %arg7: memref<1x32xf32, #tpu.memory_space<vmem>>, %arg8: memref<1x1xf32, #tpu.memory_space<vmem>>, %arg9: memref<64x1xf32, #tpu.memory_space<vmem>>, %arg10: memref<64x96xf32, #tpu.memory_space<vmem>>, %arg11: memref<64x32xf32, #tpu.memory_space<vmem>>) attributes {dimension_semantics = [], scalar_prefetch = 0 : i64, scratch_operands = 2 : i64, tpu.core_type = #tpu.core_type<tc>} {
    %c0 = arith.constant 0 : index
    %c0_0 = arith.constant 0 : index
    %0 = vector.load %arg0[%c0, %c0_0] : memref<64x16xf32, #tpu.memory_space<vmem>>, vector<64x16xf32>
    %c0_1 = arith.constant 0 : index
    %c0_2 = arith.constant 0 : index
    %1 = vector.load %arg1[%c0_1, %c0_2] : memref<16x96xf32, #tpu.memory_space<vmem>>, vector<16x96xf32>
    %cst = arith.constant dense<0.000000e+00> : vector<64x96xf32>
    %2 = tpu.matmul %0, %1, %cst {dimension_numbers = #tpu.dot_dimension_numbers<[1], [0], [0], [1], [0, 0, 1, 1], [], []>} : vector<64x16xf32>, vector<16x96xf32>, vector<64x96xf32> -> vector<64x96xf32>
    %c0_3 = arith.constant 0 : index
    %c0_4 = arith.constant 0 : index
    %3 = vector.load %arg3[%c0_3, %c0_4] : memref<1x96xf32, #tpu.memory_space<vmem>>, vector<1x96xf32>
    %4 = vector.broadcast %3 : vector<1x96xf32> to vector<64x96xf32>
    %5 = arith.addf %2, %4 : vector<64x96xf32>
    %c0_5 = arith.constant 0 : index
    %c0_6 = arith.constant 0 : index
    %6 = vector.load %arg10[%c0_5, %c0_6] : memref<64x96xf32, #tpu.memory_space<vmem>>, vector<64x96xf32>
    tpu.vector_store %arg10[%c0_5, %c0_6], %5 {strides = array<i32>} : memref<64x96xf32, #tpu.memory_space<vmem>>, vector<64x96xf32>,
    %c0_7 = arith.constant 0 : index
    %c0_8 = arith.constant 0 : index
    %7 = vector.load %arg2[%c0_7, %c0_8] : memref<32x96xf32, #tpu.memory_space<vmem>>, vector<32x96xf32>
    %c0_9 = arith.constant 0 : index
    %c0_10 = arith.constant 0 : index
    %8 = vector.load %arg4[%c0_9, %c0_10] : memref<1x32xf32, #tpu.memory_space<vmem>>, vector<1x32xf32>
    %cst_11 = arith.constant 0.000000e+00 : f32
    %9 = vector.broadcast %cst_11 : f32 to vector<8x32xf32>
    %c0_i32 = arith.constant 0 : i32
    %c8_i32 = arith.constant 8 : i32
    %10 = arith.muli %c0_i32, %c8_i32 : i32
    %11 = tpu.assume_multiple %10, 8 : i32
    %12 = arith.index_cast %11 : i32 to index
    %c0_12 = arith.constant 0 : index
    %13 = vector.load %arg10[%12, %c0_12] : memref<64x96xf32, #tpu.memory_space<vmem>>, vector<8x96xf32>
    %cst_13 = arith.constant dense<0.000000e+00> : vector<8x96xf32>
    %14 = tpu.matmul %9, %7, %cst_13 {dimension_numbers = #tpu.dot_dimension_numbers<[1], [0], [0], [1], [0, 0, 1, 1], [], []>} : vector<8x32xf32>, vector<32x96xf32>, vector<8x96xf32> -> vector<8x96xf32>
    %15 = vector.extract_strided_slice %13 {offsets = [0, 0], sizes = [8, 64], strides = [1, 1]} : vector<8x96xf32> to vector<8x64xf32>
    %16 = vector.extract_strided_slice %14 {offsets = [0, 0], sizes = [8, 64], strides = [1, 1]} : vector<8x96xf32> to vector<8x64xf32>
    %17 = arith.addf %15, %16 : vector<8x64xf32>
    %18 = arith.negf %17 : vector<8x64xf32>
    %19 = math.exp %18 : vector<8x64xf32>
    %cst_14 = arith.constant 1.000000e+00 : f32
    %20 = vector.broadcast %cst_14 : f32 to vector<8x64xf32>
    %21 = arith.addf %20, %19 : vector<8x64xf32>
    %22 = arith.divf %20, %21 : vector<8x64xf32>
    %23 = vector.extract_strided_slice %22 {offsets = [0, 0], sizes = [8, 32], strides = [1, 1]} : vector<8x64xf32> to vector<8x32xf32>
    %24 = vector.extract_strided_slice %22 {offsets = [0, 32], sizes = [8, 32], strides = [1, 1]} : vector<8x64xf32> to vector<8x32xf32>
    %25 = vector.extract_strided_slice %13 {offsets = [0, 64], sizes = [8, 32], strides = [1, 1]} : vector<8x96xf32> to vector<8x32xf32>
    %26 = vector.extract_strided_slice %14 {offsets = [0, 64], sizes = [8, 32], strides = [1, 1]} : vector<8x96xf32> to vector<8x32xf32>
    %27 = vector.broadcast %8 : vector<1x32xf32> to vector<8x32xf32>
    %28 = arith.addf %26, %27 : vector<8x32xf32>
    %29 = arith.mulf %23, %28 : vector<8x32xf32>
    %30 = arith.addf %25, %29 : vector<8x32xf32>
    %31 = math.tanh %30 : vector<8x32xf32>
    %cst_15 = arith.constant 1.000000e+00 : f32
    %32 = vector.broadcast %cst_15 : f32 to vector<8x32xf32>
    %33 = arith.subf %32, %24 : vector<8x32xf32>
    %34 = arith.mulf %33, %31 : vector<8x32xf32>
    %35 = arith.mulf %24, %9 : vector<8x32xf32>
    %36 = arith.addf %34, %35 : vector<8x32xf32>
    %37 = arith.index_cast %11 : i32 to index
    %c0_16 = arith.constant 0 : index
    %38 = vector.load %arg11[%37, %c0_16] : memref<64x32xf32, #tpu.memory_space<vmem>>, vector<8x32xf32>
    tpu.vector_store %arg11[%37, %c0_16], %36 {strides = array<i32>} : memref<64x32xf32, #tpu.memory_space<vmem>>, vector<8x32xf32>,
    %c1_i32 = arith.constant 1 : i32
    %c8_i32_17 = arith.constant 8 : i32
    %39 = arith.muli %c1_i32, %c8_i32_17 : i32
    %40 = tpu.assume_multiple %39, 8 : i32
    %41 = arith.index_cast %40 : i32 to index
    %c0_18 = arith.constant 0 : index
    %42 = vector.load %arg10[%41, %c0_18] : memref<64x96xf32, #tpu.memory_space<vmem>>, vector<8x96xf32>
    %cst_19 = arith.constant dense<0.000000e+00> : vector<8x96xf32>
    %43 = tpu.matmul %36, %7, %cst_19 {dimension_numbers = #tpu.dot_dimension_numbers<[1], [0], [0], [1], [0, 0, 1, 1], [], []>} : vector<8x32xf32>, vector<32x96xf32>, vector<8x96xf32> -> vector<8x96xf32>
    %44 = vector.extract_strided_slice %42 {offsets = [0, 0], sizes = [8, 64], strides = [1, 1]} : vector<8x96xf32> to vector<8x64xf32>
    %45 = vector.extract_strided_slice %43 {offsets = [0, 0], sizes = [8, 64], strides = [1, 1]} : vector<8x96xf32> to vector<8x64xf32>
    %46 = arith.addf %44, %45 : vector<8x64xf32>
    %47 = arith.negf %46 : vector<8x64xf32>
    %48 = math.exp %47 : vector<8x64xf32>
    %cst_20 = arith.constant 1.000000e+00 : f32
    %49 = vector.broadcast %cst_20 : f32 to vector<8x64xf32>
    %50 = arith.addf %49, %48 : vector<8x64xf32>
    %51 = arith.divf %49, %50 : vector<8x64xf32>
    %52 = vector.extract_strided_slice %51 {offsets = [0, 0], sizes = [8, 32], strides = [1, 1]} : vector<8x64xf32> to vector<8x32xf32>
    %53 = vector.extract_strided_slice %51 {offsets = [0, 32], sizes = [8, 32], strides = [1, 1]} : vector<8x64xf32> to vector<8x32xf32>
    %54 = vector.extract_strided_slice %42 {offsets = [0, 64], sizes = [8, 32], strides = [1, 1]} : vector<8x96xf32> to vector<8x32xf32>
    %55 = vector.extract_strided_slice %43 {offsets = [0, 64], sizes = [8, 32], strides = [1, 1]} : vector<8x96xf32> to vector<8x32xf32>
    %56 = vector.broadcast %8 : vector<1x32xf32> to vector<8x32xf32>
    %57 = arith.addf %55, %56 : vector<8x32xf32>
    %58 = arith.mulf %52, %57 : vector<8x32xf32>
    %59 = arith.addf %54, %58 : vector<8x32xf32>
    %60 = math.tanh %59 : vector<8x32xf32>
    %cst_21 = arith.constant 1.000000e+00 : f32
    %61 = vector.broadcast %cst_21 : f32 to vector<8x32xf32>
    %62 = arith.subf %61, %53 : vector<8x32xf32>
    %63 = arith.mulf %62, %60 : vector<8x32xf32>
    %64 = arith.mulf %53, %36 : vector<8x32xf32>
    %65 = arith.addf %63, %64 : vector<8x32xf32>
    %66 = arith.index_cast %40 : i32 to index
    %c0_22 = arith.constant 0 : index
    %67 = vector.load %arg11[%66, %c0_22] : memref<64x32xf32, #tpu.memory_space<vmem>>, vector<8x32xf32>
    tpu.vector_store %arg11[%66, %c0_22], %65 {strides = array<i32>} : memref<64x32xf32, #tpu.memory_space<vmem>>, vector<8x32xf32>,
    %c2_i32 = arith.constant 2 : i32
    %c8_i32_23 = arith.constant 8 : i32
    %68 = arith.muli %c2_i32, %c8_i32_23 : i32
    %69 = tpu.assume_multiple %68, 8 : i32
    %70 = arith.index_cast %69 : i32 to index
    %c0_24 = arith.constant 0 : index
    %71 = vector.load %arg10[%70, %c0_24] : memref<64x96xf32, #tpu.memory_space<vmem>>, vector<8x96xf32>
    %cst_25 = arith.constant dense<0.000000e+00> : vector<8x96xf32>
    %72 = tpu.matmul %65, %7, %cst_25 {dimension_numbers = #tpu.dot_dimension_numbers<[1], [0], [0], [1], [0, 0, 1, 1], [], []>} : vector<8x32xf32>, vector<32x96xf32>, vector<8x96xf32> -> vector<8x96xf32>
    %73 = vector.extract_strided_slice %71 {offsets = [0, 0], sizes = [8, 64], strides = [1, 1]} : vector<8x96xf32> to vector<8x64xf32>
    %74 = vector.extract_strided_slice %72 {offsets = [0, 0], sizes = [8, 64], strides = [1, 1]} : vector<8x96xf32> to vector<8x64xf32>
    %75 = arith.addf %73, %74 : vector<8x64xf32>
    %76 = arith.negf %75 : vector<8x64xf32>
    %77 = math.exp %76 : vector<8x64xf32>
    %cst_26 = arith.constant 1.000000e+00 : f32
    %78 = vector.broadcast %cst_26 : f32 to vector<8x64xf32>
    %79 = arith.addf %78, %77 : vector<8x64xf32>
    %80 = arith.divf %78, %79 : vector<8x64xf32>
    %81 = vector.extract_strided_slice %80 {offsets = [0, 0], sizes = [8, 32], strides = [1, 1]} : vector<8x64xf32> to vector<8x32xf32>
    %82 = vector.extract_strided_slice %80 {offsets = [0, 32], sizes = [8, 32], strides = [1, 1]} : vector<8x64xf32> to vector<8x32xf32>
    %83 = vector.extract_strided_slice %71 {offsets = [0, 64], sizes = [8, 32], strides = [1, 1]} : vector<8x96xf32> to vector<8x32xf32>
    %84 = vector.extract_strided_slice %72 {offsets = [0, 64], sizes = [8, 32], strides = [1, 1]} : vector<8x96xf32> to vector<8x32xf32>
    %85 = vector.broadcast %8 : vector<1x32xf32> to vector<8x32xf32>
    %86 = arith.addf %84, %85 : vector<8x32xf32>
    %87 = arith.mulf %81, %86 : vector<8x32xf32>
    %88 = arith.addf %83, %87 : vector<8x32xf32>
    %89 = math.tanh %88 : vector<8x32xf32>
    %cst_27 = arith.constant 1.000000e+00 : f32
    %90 = vector.broadcast %cst_27 : f32 to vector<8x32xf32>
    %91 = arith.subf %90, %82 : vector<8x32xf32>
    %92 = arith.mulf %91, %89 : vector<8x32xf32>
    %93 = arith.mulf %82, %65 : vector<8x32xf32>
    %94 = arith.addf %92, %93 : vector<8x32xf32>
    %95 = arith.index_cast %69 : i32 to index
    %c0_28 = arith.constant 0 : index
    %96 = vector.load %arg11[%95, %c0_28] : memref<64x32xf32, #tpu.memory_space<vmem>>, vector<8x32xf32>
    tpu.vector_store %arg11[%95, %c0_28], %94 {strides = array<i32>} : memref<64x32xf32, #tpu.memory_space<vmem>>, vector<8x32xf32>,
    %c3_i32 = arith.constant 3 : i32
    %c8_i32_29 = arith.constant 8 : i32
    %97 = arith.muli %c3_i32, %c8_i32_29 : i32
    %98 = tpu.assume_multiple %97, 8 : i32
    %99 = arith.index_cast %98 : i32 to index
    %c0_30 = arith.constant 0 : index
    %100 = vector.load %arg10[%99, %c0_30] : memref<64x96xf32, #tpu.memory_space<vmem>>, vector<8x96xf32>
    %cst_31 = arith.constant dense<0.000000e+00> : vector<8x96xf32>
    %101 = tpu.matmul %94, %7, %cst_31 {dimension_numbers = #tpu.dot_dimension_numbers<[1], [0], [0], [1], [0, 0, 1, 1], [], []>} : vector<8x32xf32>, vector<32x96xf32>, vector<8x96xf32> -> vector<8x96xf32>
    %102 = vector.extract_strided_slice %100 {offsets = [0, 0], sizes = [8, 64], strides = [1, 1]} : vector<8x96xf32> to vector<8x64xf32>
    %103 = vector.extract_strided_slice %101 {offsets = [0, 0], sizes = [8, 64], strides = [1, 1]} : vector<8x96xf32> to vector<8x64xf32>
    %104 = arith.addf %102, %103 : vector<8x64xf32>
    %105 = arith.negf %104 : vector<8x64xf32>
    %106 = math.exp %105 : vector<8x64xf32>
    %cst_32 = arith.constant 1.000000e+00 : f32
    %107 = vector.broadcast %cst_32 : f32 to vector<8x64xf32>
    %108 = arith.addf %107, %106 : vector<8x64xf32>
    %109 = arith.divf %107, %108 : vector<8x64xf32>
    %110 = vector.extract_strided_slice %109 {offsets = [0, 0], sizes = [8, 32], strides = [1, 1]} : vector<8x64xf32> to vector<8x32xf32>
    %111 = vector.extract_strided_slice %109 {offsets = [0, 32], sizes = [8, 32], strides = [1, 1]} : vector<8x64xf32> to vector<8x32xf32>
    %112 = vector.extract_strided_slice %100 {offsets = [0, 64], sizes = [8, 32], strides = [1, 1]} : vector<8x96xf32> to vector<8x32xf32>
    %113 = vector.extract_strided_slice %101 {offsets = [0, 64], sizes = [8, 32], strides = [1, 1]} : vector<8x96xf32> to vector<8x32xf32>
    %114 = vector.broadcast %8 : vector<1x32xf32> to vector<8x32xf32>
    %115 = arith.addf %113, %114 : vector<8x32xf32>
    %116 = arith.mulf %110, %115 : vector<8x32xf32>
    %117 = arith.addf %112, %116 : vector<8x32xf32>
    %118 = math.tanh %117 : vector<8x32xf32>
    %cst_33 = arith.constant 1.000000e+00 : f32
    %119 = vector.broadcast %cst_33 : f32 to vector<8x32xf32>
    %120 = arith.subf %119, %111 : vector<8x32xf32>
    %121 = arith.mulf %120, %118 : vector<8x32xf32>
    %122 = arith.mulf %111, %94 : vector<8x32xf32>
    %123 = arith.addf %121, %122 : vector<8x32xf32>
    %124 = arith.index_cast %98 : i32 to index
    %c0_34 = arith.constant 0 : index
    %125 = vector.load %arg11[%124, %c0_34] : memref<64x32xf32, #tpu.memory_space<vmem>>, vector<8x32xf32>
    tpu.vector_store %arg11[%124, %c0_34], %123 {strides = array<i32>} : memref<64x32xf32, #tpu.memory_space<vmem>>, vector<8x32xf32>,
    %c4_i32 = arith.constant 4 : i32
    %c8_i32_35 = arith.constant 8 : i32
    %126 = arith.muli %c4_i32, %c8_i32_35 : i32
    %127 = tpu.assume_multiple %126, 8 : i32
    %128 = arith.index_cast %127 : i32 to index
    %c0_36 = arith.constant 0 : index
    %129 = vector.load %arg10[%128, %c0_36] : memref<64x96xf32, #tpu.memory_space<vmem>>, vector<8x96xf32>
    %cst_37 = arith.constant dense<0.000000e+00> : vector<8x96xf32>
    %130 = tpu.matmul %123, %7, %cst_37 {dimension_numbers = #tpu.dot_dimension_numbers<[1], [0], [0], [1], [0, 0, 1, 1], [], []>} : vector<8x32xf32>, vector<32x96xf32>, vector<8x96xf32> -> vector<8x96xf32>
    %131 = vector.extract_strided_slice %129 {offsets = [0, 0], sizes = [8, 64], strides = [1, 1]} : vector<8x96xf32> to vector<8x64xf32>
    %132 = vector.extract_strided_slice %130 {offsets = [0, 0], sizes = [8, 64], strides = [1, 1]} : vector<8x96xf32> to vector<8x64xf32>
    %133 = arith.addf %131, %132 : vector<8x64xf32>
    %134 = arith.negf %133 : vector<8x64xf32>
    %135 = math.exp %134 : vector<8x64xf32>
    %cst_38 = arith.constant 1.000000e+00 : f32
    %136 = vector.broadcast %cst_38 : f32 to vector<8x64xf32>
    %137 = arith.addf %136, %135 : vector<8x64xf32>
    %138 = arith.divf %136, %137 : vector<8x64xf32>
    %139 = vector.extract_strided_slice %138 {offsets = [0, 0], sizes = [8, 32], strides = [1, 1]} : vector<8x64xf32> to vector<8x32xf32>
    %140 = vector.extract_strided_slice %138 {offsets = [0, 32], sizes = [8, 32], strides = [1, 1]} : vector<8x64xf32> to vector<8x32xf32>
    %141 = vector.extract_strided_slice %129 {offsets = [0, 64], sizes = [8, 32], strides = [1, 1]} : vector<8x96xf32> to vector<8x32xf32>
    %142 = vector.extract_strided_slice %130 {offsets = [0, 64], sizes = [8, 32], strides = [1, 1]} : vector<8x96xf32> to vector<8x32xf32>
    %143 = vector.broadcast %8 : vector<1x32xf32> to vector<8x32xf32>
    %144 = arith.addf %142, %143 : vector<8x32xf32>
    %145 = arith.mulf %139, %144 : vector<8x32xf32>
    %146 = arith.addf %141, %145 : vector<8x32xf32>
    %147 = math.tanh %146 : vector<8x32xf32>
    %cst_39 = arith.constant 1.000000e+00 : f32
    %148 = vector.broadcast %cst_39 : f32 to vector<8x32xf32>
    %149 = arith.subf %148, %140 : vector<8x32xf32>
    %150 = arith.mulf %149, %147 : vector<8x32xf32>
    %151 = arith.mulf %140, %123 : vector<8x32xf32>
    %152 = arith.addf %150, %151 : vector<8x32xf32>
    %153 = arith.index_cast %127 : i32 to index
    %c0_40 = arith.constant 0 : index
    %154 = vector.load %arg11[%153, %c0_40] : memref<64x32xf32, #tpu.memory_space<vmem>>, vector<8x32xf32>
    tpu.vector_store %arg11[%153, %c0_40], %152 {strides = array<i32>} : memref<64x32xf32, #tpu.memory_space<vmem>>, vector<8x32xf32>,
    %c5_i32 = arith.constant 5 : i32
    %c8_i32_41 = arith.constant 8 : i32
    %155 = arith.muli %c5_i32, %c8_i32_41 : i32
    %156 = tpu.assume_multiple %155, 8 : i32
    %157 = arith.index_cast %156 : i32 to index
    %c0_42 = arith.constant 0 : index
    %158 = vector.load %arg10[%157, %c0_42] : memref<64x96xf32, #tpu.memory_space<vmem>>, vector<8x96xf32>
    %cst_43 = arith.constant dense<0.000000e+00> : vector<8x96xf32>
    %159 = tpu.matmul %152, %7, %cst_43 {dimension_numbers = #tpu.dot_dimension_numbers<[1], [0], [0], [1], [0, 0, 1, 1], [], []>} : vector<8x32xf32>, vector<32x96xf32>, vector<8x96xf32> -> vector<8x96xf32>
    %160 = vector.extract_strided_slice %158 {offsets = [0, 0], sizes = [8, 64], strides = [1, 1]} : vector<8x96xf32> to vector<8x64xf32>
    %161 = vector.extract_strided_slice %159 {offsets = [0, 0], sizes = [8, 64], strides = [1, 1]} : vector<8x96xf32> to vector<8x64xf32>
    %162 = arith.addf %160, %161 : vector<8x64xf32>
    %163 = arith.negf %162 : vector<8x64xf32>
    %164 = math.exp %163 : vector<8x64xf32>
    %cst_44 = arith.constant 1.000000e+00 : f32
    %165 = vector.broadcast %cst_44 : f32 to vector<8x64xf32>
    %166 = arith.addf %165, %164 : vector<8x64xf32>
    %167 = arith.divf %165, %166 : vector<8x64xf32>
    %168 = vector.extract_strided_slice %167 {offsets = [0, 0], sizes = [8, 32], strides = [1, 1]} : vector<8x64xf32> to vector<8x32xf32>
    %169 = vector.extract_strided_slice %167 {offsets = [0, 32], sizes = [8, 32], strides = [1, 1]} : vector<8x64xf32> to vector<8x32xf32>
    %170 = vector.extract_strided_slice %158 {offsets = [0, 64], sizes = [8, 32], strides = [1, 1]} : vector<8x96xf32> to vector<8x32xf32>
    %171 = vector.extract_strided_slice %159 {offsets = [0, 64], sizes = [8, 32], strides = [1, 1]} : vector<8x96xf32> to vector<8x32xf32>
    %172 = vector.broadcast %8 : vector<1x32xf32> to vector<8x32xf32>
    %173 = arith.addf %171, %172 : vector<8x32xf32>
    %174 = arith.mulf %168, %173 : vector<8x32xf32>
    %175 = arith.addf %170, %174 : vector<8x32xf32>
    %176 = math.tanh %175 : vector<8x32xf32>
    %cst_45 = arith.constant 1.000000e+00 : f32
    %177 = vector.broadcast %cst_45 : f32 to vector<8x32xf32>
    %178 = arith.subf %177, %169 : vector<8x32xf32>
    %179 = arith.mulf %178, %176 : vector<8x32xf32>
    %180 = arith.mulf %169, %152 : vector<8x32xf32>
    %181 = arith.addf %179, %180 : vector<8x32xf32>
    %182 = arith.index_cast %156 : i32 to index
    %c0_46 = arith.constant 0 : index
    %183 = vector.load %arg11[%182, %c0_46] : memref<64x32xf32, #tpu.memory_space<vmem>>, vector<8x32xf32>
    tpu.vector_store %arg11[%182, %c0_46], %181 {strides = array<i32>} : memref<64x32xf32, #tpu.memory_space<vmem>>, vector<8x32xf32>,
    %c6_i32 = arith.constant 6 : i32
    %c8_i32_47 = arith.constant 8 : i32
    %184 = arith.muli %c6_i32, %c8_i32_47 : i32
    %185 = tpu.assume_multiple %184, 8 : i32
    %186 = arith.index_cast %185 : i32 to index
    %c0_48 = arith.constant 0 : index
    %187 = vector.load %arg10[%186, %c0_48] : memref<64x96xf32, #tpu.memory_space<vmem>>, vector<8x96xf32>
    %cst_49 = arith.constant dense<0.000000e+00> : vector<8x96xf32>
    %188 = tpu.matmul %181, %7, %cst_49 {dimension_numbers = #tpu.dot_dimension_numbers<[1], [0], [0], [1], [0, 0, 1, 1], [], []>} : vector<8x32xf32>, vector<32x96xf32>, vector<8x96xf32> -> vector<8x96xf32>
    %189 = vector.extract_strided_slice %187 {offsets = [0, 0], sizes = [8, 64], strides = [1, 1]} : vector<8x96xf32> to vector<8x64xf32>
    %190 = vector.extract_strided_slice %188 {offsets = [0, 0], sizes = [8, 64], strides = [1, 1]} : vector<8x96xf32> to vector<8x64xf32>
    %191 = arith.addf %189, %190 : vector<8x64xf32>
    %192 = arith.negf %191 : vector<8x64xf32>
    %193 = math.exp %192 : vector<8x64xf32>
    %cst_50 = arith.constant 1.000000e+00 : f32
    %194 = vector.broadcast %cst_50 : f32 to vector<8x64xf32>
    %195 = arith.addf %194, %193 : vector<8x64xf32>
    %196 = arith.divf %194, %195 : vector<8x64xf32>
    %197 = vector.extract_strided_slice %196 {offsets = [0, 0], sizes = [8, 32], strides = [1, 1]} : vector<8x64xf32> to vector<8x32xf32>
    %198 = vector.extract_strided_slice %196 {offsets = [0, 32], sizes = [8, 32], strides = [1, 1]} : vector<8x64xf32> to vector<8x32xf32>
    %199 = vector.extract_strided_slice %187 {offsets = [0, 64], sizes = [8, 32], strides = [1, 1]} : vector<8x96xf32> to vector<8x32xf32>
    %200 = vector.extract_strided_slice %188 {offsets = [0, 64], sizes = [8, 32], strides = [1, 1]} : vector<8x96xf32> to vector<8x32xf32>
    %201 = vector.broadcast %8 : vector<1x32xf32> to vector<8x32xf32>
    %202 = arith.addf %200, %201 : vector<8x32xf32>
    %203 = arith.mulf %197, %202 : vector<8x32xf32>
    %204 = arith.addf %199, %203 : vector<8x32xf32>
    %205 = math.tanh %204 : vector<8x32xf32>
    %cst_51 = arith.constant 1.000000e+00 : f32
    %206 = vector.broadcast %cst_51 : f32 to vector<8x32xf32>
    %207 = arith.subf %206, %198 : vector<8x32xf32>
    %208 = arith.mulf %207, %205 : vector<8x32xf32>
    %209 = arith.mulf %198, %181 : vector<8x32xf32>
    %210 = arith.addf %208, %209 : vector<8x32xf32>
    %211 = arith.index_cast %185 : i32 to index
    %c0_52 = arith.constant 0 : index
    %212 = vector.load %arg11[%211, %c0_52] : memref<64x32xf32, #tpu.memory_space<vmem>>, vector<8x32xf32>
    tpu.vector_store %arg11[%211, %c0_52], %210 {strides = array<i32>} : memref<64x32xf32, #tpu.memory_space<vmem>>, vector<8x32xf32>,
    %c7_i32 = arith.constant 7 : i32
    %c8_i32_53 = arith.constant 8 : i32
    %213 = arith.muli %c7_i32, %c8_i32_53 : i32
    %214 = tpu.assume_multiple %213, 8 : i32
    %215 = arith.index_cast %214 : i32 to index
    %c0_54 = arith.constant 0 : index
    %216 = vector.load %arg10[%215, %c0_54] : memref<64x96xf32, #tpu.memory_space<vmem>>, vector<8x96xf32>
    %cst_55 = arith.constant dense<0.000000e+00> : vector<8x96xf32>
    %217 = tpu.matmul %210, %7, %cst_55 {dimension_numbers = #tpu.dot_dimension_numbers<[1], [0], [0], [1], [0, 0, 1, 1], [], []>} : vector<8x32xf32>, vector<32x96xf32>, vector<8x96xf32> -> vector<8x96xf32>
    %218 = vector.extract_strided_slice %216 {offsets = [0, 0], sizes = [8, 64], strides = [1, 1]} : vector<8x96xf32> to vector<8x64xf32>
    %219 = vector.extract_strided_slice %217 {offsets = [0, 0], sizes = [8, 64], strides = [1, 1]} : vector<8x96xf32> to vector<8x64xf32>
    %220 = arith.addf %218, %219 : vector<8x64xf32>
    %221 = arith.negf %220 : vector<8x64xf32>
    %222 = math.exp %221 : vector<8x64xf32>
    %cst_56 = arith.constant 1.000000e+00 : f32
    %223 = vector.broadcast %cst_56 : f32 to vector<8x64xf32>
    %224 = arith.addf %223, %222 : vector<8x64xf32>
    %225 = arith.divf %223, %224 : vector<8x64xf32>
    %226 = vector.extract_strided_slice %225 {offsets = [0, 0], sizes = [8, 32], strides = [1, 1]} : vector<8x64xf32> to vector<8x32xf32>
    %227 = vector.extract_strided_slice %225 {offsets = [0, 32], sizes = [8, 32], strides = [1, 1]} : vector<8x64xf32> to vector<8x32xf32>
    %228 = vector.extract_strided_slice %216 {offsets = [0, 64], sizes = [8, 32], strides = [1, 1]} : vector<8x96xf32> to vector<8x32xf32>
    %229 = vector.extract_strided_slice %217 {offsets = [0, 64], sizes = [8, 32], strides = [1, 1]} : vector<8x96xf32> to vector<8x32xf32>
    %230 = vector.broadcast %8 : vector<1x32xf32> to vector<8x32xf32>
    %231 = arith.addf %229, %230 : vector<8x32xf32>
    %232 = arith.mulf %226, %231 : vector<8x32xf32>
    %233 = arith.addf %228, %232 : vector<8x32xf32>
    %234 = math.tanh %233 : vector<8x32xf32>
    %cst_57 = arith.constant 1.000000e+00 : f32
    %235 = vector.broadcast %cst_57 : f32 to vector<8x32xf32>
    %236 = arith.subf %235, %227 : vector<8x32xf32>
    %237 = arith.mulf %236, %234 : vector<8x32xf32>
    %238 = arith.mulf %227, %210 : vector<8x32xf32>
    %239 = arith.addf %237, %238 : vector<8x32xf32>
    %240 = arith.index_cast %214 : i32 to index
    %c0_58 = arith.constant 0 : index
    %241 = vector.load %arg11[%240, %c0_58] : memref<64x32xf32, #tpu.memory_space<vmem>>, vector<8x32xf32>
    tpu.vector_store %arg11[%240, %c0_58], %239 {strides = array<i32>} : memref<64x32xf32, #tpu.memory_space<vmem>>, vector<8x32xf32>,
    %c8_i32_59 = arith.constant 8 : i32
    %c0_60 = arith.constant 0 : index
    %c0_61 = arith.constant 0 : index
    %242 = vector.load %arg11[%c0_60, %c0_61] : memref<64x32xf32, #tpu.memory_space<vmem>>, vector<64x32xf32>
    %c0_62 = arith.constant 0 : index
    %c0_63 = arith.constant 0 : index
    %243 = vector.load %arg5[%c0_62, %c0_63] : memref<32x32xf32, #tpu.memory_space<vmem>>, vector<32x32xf32>
    %cst_64 = arith.constant dense<0.000000e+00> : vector<64x32xf32>
    %244 = tpu.matmul %242, %243, %cst_64 {dimension_numbers = #tpu.dot_dimension_numbers<[1], [0], [0], [1], [0, 0, 1, 1], [], []>} : vector<64x32xf32>, vector<32x32xf32>, vector<64x32xf32> -> vector<64x32xf32>
    %c0_65 = arith.constant 0 : index
    %c0_66 = arith.constant 0 : index
    %245 = vector.load %arg6[%c0_65, %c0_66] : memref<1x32xf32, #tpu.memory_space<vmem>>, vector<1x32xf32>
    %246 = vector.broadcast %245 : vector<1x32xf32> to vector<64x32xf32>
    %247 = arith.addf %244, %246 : vector<64x32xf32>
    %cst_67 = arith.constant 0.000000e+00 : f32
    %248 = vector.broadcast %cst_67 : f32 to vector<64x32xf32>
    %249 = arith.maximumf %247, %248 : vector<64x32xf32>
    %c0_68 = arith.constant 0 : index
    %c0_69 = arith.constant 0 : index
    %250 = vector.load %arg7[%c0_68, %c0_69] : memref<1x32xf32, #tpu.memory_space<vmem>>, vector<1x32xf32>
    %251 = vector.broadcast %250 : vector<1x32xf32> to vector<64x32xf32>
    %252 = arith.mulf %249, %251 : vector<64x32xf32>
    %cst_70 = arith.constant dense<0.000000e+00> : vector<64xf32>
    %253 = vector.multi_reduction <add>, %252, %cst_70 [1] : vector<64x32xf32> to vector<64xf32>
    %254 = vector.shape_cast %253 : vector<64xf32> to vector<64x1xf32>
    %c0_71 = arith.constant 0 : index
    %c0_72 = arith.constant 0 : index
    %255 = vector.load %arg8[%c0_71, %c0_72] : memref<1x1xf32, #tpu.memory_space<vmem>>, vector<1x1xf32>
    %256 = vector.broadcast %255 : vector<1x1xf32> to vector<64x1xf32>
    %257 = arith.addf %254, %256 : vector<64x1xf32>
    %c0_73 = arith.constant 0 : index
    %c0_74 = arith.constant 0 : index
    %258 = vector.load %arg9[%c0_73, %c0_74] : memref<64x1xf32, #tpu.memory_space<vmem>>, vector<64x1xf32>
    tpu.vector_store %arg9[%c0_73, %c0_74], %257 {strides = array<i32>} : memref<64x1xf32, #tpu.memory_space<vmem>>, vector<64x1xf32>,
    return
  }
}

</mosaic_0001>

<llo_original>
// kernel: tpu_custom_call.1
$region0: #{tpu_custom_call.1}
  #allocation0 [shape = 'u32[]', space=smem, size = 0x4, offset = 0x4, fixed_abs, tag = 'smem constant byte address 0x4 - core index']
  #allocation1 [shape = 'u32[144,128]{1,0:T(1,128)}', space=vmem, size = 0x12000, scoped, tag = 'internal scratch']
  #allocation2 [shape = 'f32[64,96]{1,0:T(8,128)}', space=vmem, size = 0x8000, scoped, tag = 'scratch operand']
  #allocation3 [shape = 'f32[64,32]{1,0:T(8,128)}', space=vmem, size = 0x8000, scoped, tag = 'scratch operand']
  #allocation4 [shape = 'f32[1,1]{1,0:T(1,128)S(1)}', space=vmem, size = 0x200, scoped, tag = 'scoped memory for tpu_custom_call.1']
  %s0 = inlined_call_operand.vmem [shape: f32[64,16], index: 0, kind: input, shape index: {}]
  %s1 = inlined_call_operand.vmem [shape: f32[16,96], index: 1, kind: input, shape index: {}]
  %s2 = inlined_call_operand.vmem [shape: f32[32,96], index: 2, kind: input, shape index: {}]
  %s3 = inlined_call_operand.vmem [shape: f32[1,96], index: 3, kind: input, shape index: {}]
  %s4 = inlined_call_operand.vmem [shape: f32[1,32], index: 4, kind: input, shape index: {}]
  %s5 = inlined_call_operand.vmem [shape: f32[32,32], index: 5, kind: input, shape index: {}]
  %s6 = inlined_call_operand.vmem [shape: f32[1,32], index: 6, kind: input, shape index: {}]
  %s7 = inlined_call_operand.vmem [shape: f32[1,32], index: 7, kind: input, shape index: {}]
  %s8 = inlined_call_operand.<no memory space> [shape: f32[1,1], index: 8, kind: input, shape index: {}]
  %s9 = inlined_call_operand.vmem [shape: f32[64,1], index: 9, kind: output, shape index: {}]
  %s10 = sld [smem:[#allocation0]]
  $region46: #{tpu_custom_call.1} parent=0
    _
  %s12 = ssub.s32 1, %s10
  %s13 = scalar_select 0, %s12, %s10
  %v14 = vstv %s8
  %15 = vst [vmem:[#allocation4] sm:$0x1] %v14
  // Predicated region
  $region2: #{tpu_custom_call.1} parent=0 // pred_check
    _
  $region3: #{tpu_custom_call.1} parent=0 // pred_check_branch
    %17 = sbr.rel (0) target = $region5
  $region4: #{tpu_custom_call.1} parent=0 // pred_region
    _
  $region5: #{tpu_custom_call.1} parent=0 // pred_fallthru
    _
  // Predicated region
  $region6: #{tpu_custom_call.1} parent=0 // pred_check
    _
  $region7: #{tpu_custom_call.1} parent=0 // pred_check_branch
    %19 = sbr.rel (0) target = $region9
  $region8: #{tpu_custom_call.1} parent=0 // pred_region
    _
  $region9: #{tpu_custom_call.1} parent=0 // pred_fallthru
    _
  // Predicated region
  $region10: #{tpu_custom_call.1} parent=0 // pred_check
    _
  $region11: #{tpu_custom_call.1} parent=0 // pred_check_branch
    %21 = sbr.rel (0) target = $region13
  $region12: #{tpu_custom_call.1} parent=0 // pred_region
    _
  $region13: #{tpu_custom_call.1} parent=0 // pred_fallthru
    _
  // Predicated region
  $region14: #{tpu_custom_call.1} parent=0 // pred_check
    _
  $region15: #{tpu_custom_call.1} parent=0 // pred_check_branch
    %23 = sbr.rel (0) target = $region17
  $region16: #{tpu_custom_call.1} parent=0 // pred_region
    _
  $region17: #{tpu_custom_call.1} parent=0 // pred_fallthru
    _
  // Predicated region
  $region18: #{tpu_custom_call.1} parent=0 // pred_check
    _
  $region19: #{tpu_custom_call.1} parent=0 // pred_check_branch
    %25 = sbr.rel (0) target = $region21
  $region20: #{tpu_custom_call.1} parent=0 // pred_region
    _
  $region21: #{tpu_custom_call.1} parent=0 // pred_fallthru
    _
  // Predicated region
  $region22: #{tpu_custom_call.1} parent=0 // pred_check
    _
  $region23: #{tpu_custom_call.1} parent=0 // pred_check_branch
    %27 = sbr.rel (0) target = $region25
  $region24: #{tpu_custom_call.1} parent=0 // pred_region
    _
  $region25: #{tpu_custom_call.1} parent=0 // pred_fallthru
    _
  // Predicated region
  $region26: #{tpu_custom_call.1} parent=0 // pred_check
    _
  $region27: #{tpu_custom_call.1} parent=0 // pred_check_branch
    %29 = sbr.rel (0) target = $region29
  $region28: #{tpu_custom_call.1} parent=0 // pred_region
    _
  $region29: #{tpu_custom_call.1} parent=0 // pred_fallthru
    _
  // Predicated region
  $region30: #{tpu_custom_call.1} parent=0 // pred_check
    _
  $region31: #{tpu_custom_call.1} parent=0 // pred_check_branch
    %31 = sbr.rel (0) target = $region33
  $region32: #{tpu_custom_call.1} parent=0 // pred_region
    _
  $region33: #{tpu_custom_call.1} parent=0 // pred_fallthru
    _
  // Predicated region
  $region34: #{tpu_custom_call.1} parent=0 // pred_check
    _
  $region35: #{tpu_custom_call.1} parent=0 // pred_check_branch
    %33 = sbr.rel (0) target = $region37
  $region36: #{tpu_custom_call.1} parent=0 // pred_region
    _
  $region37: #{tpu_custom_call.1} parent=0 // pred_fallthru
    _
  %v34 = vld [vmem:[%s0] sm:$0xff]
  %v35 = vld [vmem:[%s0 + $0x8] sm:$0xff]
  %v36 = vld [vmem:[%s0 + $0x10] sm:$0xff]
  %v37 = vld [vmem:[%s0 + $0x18] sm:$0xff]
  %v38 = vld [vmem:[%s0 + $0x20] sm:$0xff]
  %v39 = vld [vmem:[%s0 + $0x28] sm:$0xff]
  %v40 = vld [vmem:[%s0 + $0x30] sm:$0xff]
  %v41 = vld [vmem:[%s0 + $0x38] sm:$0xff]
  %v42 = vld [vmem:[%s1] sm:$0xff]
  %v43 = vld [vmem:[%s1 + $0x8] sm:$0xff]
  %v44 = vld [vmem:[%s3] sm:$0x1]
  %v46 = vlaneseq
  %v47 = vshrl.u32 %v46, 7
  %v48 = vsub.s32 0, %v47
  %v49 = vrot.slane %v44, %v48
  %vm51 = vcmask 130048
  %v53 = vsel %vm51, %v34, 0
  %v56 = vsel %vm51, %v35, 0
  %v59 = vsel %vm51, %v36, 0
  %v62 = vsel %vm51, %v37, 0
  %v65 = vsel %vm51, %v38, 0
  %v68 = vsel %vm51, %v39, 0
  %v71 = vsel %vm51, %v40, 0
  %v74 = vsel %vm51, %v41, 0
  %76 = vmatprep.subr.mxu0 0.0
  %77 = vmatpush1.msra.mxu0 0.0
  %78 = vmatprep.subr.mxu0 0.0
  %79 = vmatpush1.msra.mxu0 0.0
  %80 = vmatprep.subr.mxu0 0.0
  %81 = vmatpush1.msra.mxu0 0.0
  %82 = vmatprep.subr.mxu0 0.0
  %83 = vmatpush1.msra.mxu0 0.0
  %84 = vmatprep.subr.mxu0 0.0
  %85 = vmatpush1.msra.mxu0 0.0
  %86 = vmatprep.subr.mxu0 0.0
  %87 = vmatpush1.msra.mxu0 0.0
  %88 = vmatprep.subr.mxu0 0.0
  %89 = vmatpush1.msra.mxu0 0.0
  %90 = vmatprep.subr.mxu0 0.0
  %91 = vmatpush1.msra.mxu0 0.0
  %92 = vmatprep.subr.mxu0 0.0
  %93 = vmatpush1.msra.mxu0 0.0
  %94 = vmatprep.subr.mxu0 0.0
  %95 = vmatpush1.msra.mxu0 0.0
  %96 = vmatprep.subr.mxu0 0.0
  %97 = vmatpush1.msra.mxu0 0.0
  %98 = vmatprep.subr.mxu0 0.0
  %99 = vmatpush1.msra.mxu0 0.0
  %100 = vmatprep.subr.mxu0 0.0
  %101 = vmatpush1.msra.mxu0 0.0
  %102 = vmatprep.subr.mxu0 0.0
  %103 = vmatpush1.msra.mxu0 0.0
  %104 = vmatprep.subr.mxu0 0.0
  %105 = vmatpush1.msra.mxu0 %v43
  %106 = vmatprep.subr.mxu0 0.0
  %107 = vmatpush1.msra.mxu0 %v42
  %108 = vmatprep.subr.mxu0 0.0
  %109 = vmatpush2.msra.mxu0 0.0
  %110 = vmatprep.subr.mxu0 0.0
  %111 = vmatpush2.msra.mxu0 0.0
  %112 = vmatprep.subr.mxu0 0.0
  %113 = vmatpush2.msra.mxu0 0.0
  %114 = vmatprep.subr.mxu0 0.0
  %115 = vmatpush2.msra.mxu0 0.0
  %116 = vmatprep.subr.mxu0 0.0
  %117 = vmatpush2.msra.mxu0 0.0
  %118 = vmatprep.subr.mxu0 0.0
  %119 = vmatpush2.msra.mxu0 0.0
  %120 = vmatprep.subr.mxu0 0.0
  %121 = vmatpush2.msra.mxu0 0.0
  %122 = vmatprep.subr.mxu0 0.0
  %123 = vmatpush2.msra.mxu0 0.0
  %124 = vmatprep.subr.mxu0 0.0
  %125 = vmatpush2.msra.mxu0 0.0
  %126 = vmatprep.subr.mxu0 0.0
  %127 = vmatpush2.msra.mxu0 0.0
  %128 = vmatprep.subr.mxu0 0.0
  %129 = vmatpush2.msra.mxu0 0.0
  %130 = vmatprep.subr.mxu0 0.0
  %131 = vmatpush2.msra.mxu0 0.0
  %132 = vmatprep.subr.mxu0 0.0
  %133 = vmatpush2.msra.mxu0 0.0
  %134 = vmatprep.subr.mxu0 0.0
  %135 = vmatpush2.msra.mxu0 0.0
  %136 = vmatprep.subr.mxu0 0.0
  %137 = vmatpush2.msra.mxu0 0.0
  %138 = vmatprep.subr.mxu0 0.0
  %139 = vmatpush2.msra.mxu0 0.0
  %140 = vmatprep.mubr.f32.mxu0 0.0
  %141 = vmatmul.mubr.f32.gmra.mxu0 %v53
  %v142 = vpop.f32.mrf.mxu0
  %v143 = vadd.f32 %v49, %v142
  %v144 = vpop.f32.mrf.mxu0
  %145 = vmatprep.mubr.f32.mxu0 0.0
  %146 = vmatmul.mubr.f32.gmra.mxu0 %v56
  %v147 = vpop.f32.mrf.mxu0
  %v148 = vadd.f32 %v49, %v147
  %v149 = vpop.f32.mrf.mxu0
  %150 = vmatprep.mubr.f32.mxu0 0.0
  %151 = vmatmul.mubr.f32.gmra.mxu0 %v59
  %v152 = vpop.f32.mrf.mxu0
  %v153 = vadd.f32 %v49, %v152
  %v154 = vpop.f32.mrf.mxu0
  %155 = vmatprep.mubr.f32.mxu0 0.0
  %156 = vmatmul.mubr.f32.gmra.mxu0 %v62
  %v157 = vpop.f32.mrf.mxu0
  %v158 = vadd.f32 %v49, %v157
  %v159 = vpop.f32.mrf.mxu0
  %160 = vmatprep.mubr.f32.mxu0 0.0
  %161 = vmatmul.mubr.f32.gmra.mxu0 %v65
  %v162 = vpop.f32.mrf.mxu0
  %v163 = vadd.f32 %v49, %v162
  %v164 = vpop.f32.mrf.mxu0
  %165 = vmatprep.mubr.f32.mxu0 0.0
  %166 = vmatmul.mubr.f32.gmra.mxu0 %v68
  %v167 = vpop.f32.mrf.mxu0
  %v168 = vadd.f32 %v49, %v167
  %v169 = vpop.f32.mrf.mxu0
  %170 = vmatprep.mubr.f32.mxu0 0.0
  %171 = vmatmul.mubr.f32.gmra.mxu0 %v71
  %v172 = vpop.f32.mrf.mxu0
  %v173 = vadd.f32 %v49, %v172
  %v174 = vpop.f32.mrf.mxu0
  %175 = vmatprep.mubr.f32.mxu0 0.0
  %176 = vmatmul.mubr.f32.gmra.mxu0 %v74
  %v177 = vpop.f32.mrf.mxu0
  %v178 = vadd.f32 %v49, %v177
  %v179 = vpop.f32.mrf.mxu0
  %180 = vdwg.mxu0
  %vm181 = vcmask 785408
  %182 = vst.msk [vmem:[#allocation2] sm:$0xff] %vm181, %v143
  %183 = vst.msk [vmem:[#allocation2 + $0x8] sm:$0xff] %vm181, %v148
  %184 = vst.msk [vmem:[#allocation2 + $0x10] sm:$0xff] %vm181, %v153
  %185 = vst.msk [vmem:[#allocation2 + $0x18] sm:$0xff] %vm181, %v158
  %186 = vst.msk [vmem:[#allocation2 + $0x20] sm:$0xff] %vm181, %v163
  %187 = vst.msk [vmem:[#allocation2 + $0x28] sm:$0xff] %vm181, %v168
  %188 = vst.msk [vmem:[#allocation2 + $0x30] sm:$0xff] %vm181, %v173
  %189 = vst.msk [vmem:[#allocation2 + $0x38] sm:$0xff] %vm181, %v178
  %v190 = vld [vmem:[%s2] sm:$0xff]
  %v191 = vld [vmem:[%s2 + $0x8] sm:$0xff]
  %v192 = vld [vmem:[%s2 + $0x10] sm:$0xff]
  %v193 = vld [vmem:[%s2 + $0x18] sm:$0xff]
  %v194 = vld [vmem:[%s4] sm:$0x1]
  %v195 = vld [vmem:[#allocation2] sm:$0xff]
  %vm196 = vcmask 261120
  %v198 = vsel %vm196, 0.0, 0
  %200 = vmatprep.subr.mxu0 0.0
  %201 = vmatpush1.msra.mxu0 0.0
  %202 = vmatprep.subr.mxu0 0.0
  %203 = vmatpush1.msra.mxu0 0.0
  %204 = vmatprep.subr.mxu0 0.0
  %205 = vmatpush1.msra.mxu0 0.0
  %206 = vmatprep.subr.mxu0 0.0
  %207 = vmatpush1.msra.mxu0 0.0
  %208 = vmatprep.subr.mxu0 0.0
  %209 = vmatpush1.msra.mxu0 0.0
  %210 = vmatprep.subr.mxu0 0.0
  %211 = vmatpush1.msra.mxu0 0.0
  %212 = vmatprep.subr.mxu0 0.0
  %213 = vmatpush1.msra.mxu0 0.0
  %214 = vmatprep.subr.mxu0 0.0
  %215 = vmatpush1.msra.mxu0 0.0
  %216 = vmatprep.subr.mxu0 0.0
  %217 = vmatpush1.msra.mxu0 0.0
  %218 = vmatprep.subr.mxu0 0.0
  %219 = vmatpush1.msra.mxu0 0.0
  %220 = vmatprep.subr.mxu0 0.0
  %221 = vmatpush1.msra.mxu0 0.0
  %222 = vmatprep.subr.mxu0 0.0
  %223 = vmatpush1.msra.mxu0 0.0
  %224 = vmatprep.subr.mxu0 0.0
  %225 = vmatpush1.msra.mxu0 %v193
  %226 = vmatprep.subr.mxu0 0.0
  %227 = vmatpush1.msra.mxu0 %v192
  %228 = vmatprep.subr.mxu0 0.0
  %229 = vmatpush1.msra.mxu0 %v191
  %230 = vmatprep.subr.mxu0 0.0
  %231 = vmatpush1.msra.mxu0 %v190
  %232 = vmatprep.subr.mxu0 0.0
  %233 = vmatpush2.msra.mxu0 0.0
  %234 = vmatprep.subr.mxu0 0.0
  %235 = vmatpush2.msra.mxu0 0.0
  %236 = vmatprep.subr.mxu0 0.0
  %237 = vmatpush2.msra.mxu0 0.0
  %238 = vmatprep.subr.mxu0 0.0
  %239 = vmatpush2.msra.mxu0 0.0
  %240 = vmatprep.subr.mxu0 0.0
  %241 = vmatpush2.msra.mxu0 0.0
  %242 = vmatprep.subr.mxu0 0.0
  %243 = vmatpush2.msra.mxu0 0.0
  %244 = vmatprep.subr.mxu0 0.0
  %245 = vmatpush2.msra.mxu0 0.0
  %246 = vmatprep.subr.mxu0 0.0
  %247 = vmatpush2.msra.mxu0 0.0
  %248 = vmatprep.subr.mxu0 0.0
  %249 = vmatpush2.msra.mxu0 0.0
  %250 = vmatprep.subr.mxu0 0.0
  %251 = vmatpush2.msra.mxu0 0.0
  %252 = vmatprep.subr.mxu0 0.0
  %253 = vmatpush2.msra.mxu0 0.0
  %254 = vmatprep.subr.mxu0 0.0
  %255 = vmatpush2.msra.mxu0 0.0
  %256 = vmatprep.subr.mxu0 0.0
  %257 = vmatpush2.msra.mxu0 0.0
  %258 = vmatprep.subr.mxu0 0.0
  %259 = vmatpush2.msra.mxu0 0.0
  %260 = vmatprep.subr.mxu0 0.0
  %261 = vmatpush2.msra.mxu0 0.0
  %262 = vmatprep.subr.mxu0 0.0
  %263 = vmatpush2.msra.mxu0 0.0
  %264 = vmatprep.mubr.f32.mxu0 0.0
  %265 = vmatmul.mubr.f32.gmra.mxu0 %v198
  %v266 = vpop.f32.mrf.mxu0
  %v267 = vadd.f32 0.0, %v266
  %v268 = vpop.f32.mrf.mxu0
  %269 = vdwg.mxu0
  %v270 = vadd.f32 %v195, %v267
  %v271 = vxor.u32 %v270, 2147483648
  %v272 = vmul.f32 %v271, 1.442695
  %v273 = vpow.pop %v272
  %v274 = vadd.f32 %v273, 1.0
  %v275 = vrcp.pop %v274
  %v276 = vmul.f32 1.0, %v275
  %v278 = vlaneseq
  %v279 = vshrl.u32 %v278, 7
  %v280 = vsub.s32 0, %v279
  %v281 = vrot.slane %v194, %v280
  %282 = vrot.lane.b32.xlu0 %v281, 64
  %v283 = vpop.permute.xlu0 %282
  %v285 = vadd.f32 %v267, %v283
  %287 = vrot.lane.b32.xlu0 %v285, 64
  %v288 = vpop.permute.xlu0 %287
  %v290 = vmul.f32 %v276, %v288
  %292 = vrot.lane.b32.xlu0 %v290, 64
  %v293 = vpop.permute.xlu0 %292
  %v295 = vadd.f32 %v195, %v293
  %v296 = vtanh.pop %v295
  %v297 = vsub.f32 1.0, %v276
  %299 = vrot.lane.b32.xlu0 %v296, 96
  %v300 = vpop.permute.xlu0 %299
  %v302 = vmul.f32 %v297, %v300
  %v303 = vmul.f32 %v276, 0.0
  %v304 = vadd.f32 %v302, %v303
  %306 = vrot.lane.b32.xlu0 %v304, 96
  %v307 = vpop.permute.xlu0 %306
  %309 = vst.msk [vmem:[#allocation3] sm:$0xff] %vm196, %v307
  %s310 = scalar_lea.vmem [#allocation2], 8
  %v311 = vld [vmem:[%s310] sm:$0xff]
  %v312 = vsel %vm196, %v307, 0
  %314 = vmatprep.subr.mxu0 0.0
  %315 = vmatpush1.msra.mxu0 0.0
  %316 = vmatprep.subr.mxu0 0.0
  %317 = vmatpush1.msra.mxu0 0.0
  %318 = vmatprep.subr.mxu0 0.0
  %319 = vmatpush1.msra.mxu0 0.0
  %320 = vmatprep.subr.mxu0 0.0
  %321 = vmatpush1.msra.mxu0 0.0
  %322 = vmatprep.subr.mxu0 0.0
  %323 = vmatpush1.msra.mxu0 0.0
  %324 = vmatprep.subr.mxu0 0.0
  %325 = vmatpush1.msra.mxu0 0.0
  %326 = vmatprep.subr.mxu0 0.0
  %327 = vmatpush1.msra.mxu0 0.0
  %328 = vmatprep.subr.mxu0 0.0
  %329 = vmatpush1.msra.mxu0 0.0
  %330 = vmatprep.subr.mxu0 0.0
  %331 = vmatpush1.msra.mxu0 0.0
  %332 = vmatprep.subr.mxu0 0.0
  %333 = vmatpush1.msra.mxu0 0.0
  %334 = vmatprep.subr.mxu0 0.0
  %335 = vmatpush1.msra.mxu0 0.0
  %336 = vmatprep.subr.mxu0 0.0
  %337 = vmatpush1.msra.mxu0 0.0
  %338 = vmatprep.subr.mxu0 0.0
  %339 = vmatpush1.msra.mxu0 %v193
  %340 = vmatprep.subr.mxu0 0.0
  %341 = vmatpush1.msra.mxu0 %v192
  %342 = vmatprep.subr.mxu0 0.0
  %343 = vmatpush1.msra.mxu0 %v191
  %344 = vmatprep.subr.mxu0 0.0
  %345 = vmatpush1.msra.mxu0 %v190
  %346 = vmatprep.subr.mxu0 0.0
  %347 = vmatpush2.msra.mxu0 0.0
  %348 = vmatprep.subr.mxu0 0.0
  %349 = vmatpush2.msra.mxu0 0.0
  %350 = vmatprep.subr.mxu0 0.0
  %351 = vmatpush2.msra.mxu0 0.0
  %352 = vmatprep.subr.mxu0 0.0
  %353 = vmatpush2.msra.mxu0 0.0
  %354 = vmatprep.subr.mxu0 0.0
  %355 = vmatpush2.msra.mxu0 0.0
  %356 = vmatprep.subr.mxu0 0.0
  %357 = vmatpush2.msra.mxu0 0.0
  %358 = vmatprep.subr.mxu0 0.0
  %359 = vmatpush2.msra.mxu0 0.0
  %360 = vmatprep.subr.mxu0 0.0
  %361 = vmatpush2.msra.mxu0 0.0
  %362 = vmatprep.subr.mxu0 0.0
  %363 = vmatpush2.msra.mxu0 0.0
  %364 = vmatprep.subr.mxu0 0.0
  %365 = vmatpush2.msra.mxu0 0.0
  %366 = vmatprep.subr.mxu0 0.0
  %367 = vmatpush2.msra.mxu0 0.0
  %368 = vmatprep.subr.mxu0 0.0
  %369 = vmatpush2.msra.mxu0 0.0
  %370 = vmatprep.subr.mxu0 0.0
  %371 = vmatpush2.msra.mxu0 0.0
  %372 = vmatprep.subr.mxu0 0.0
  %373 = vmatpush2.msra.mxu0 0.0
  %374 = vmatprep.subr.mxu0 0.0
  %375 = vmatpush2.msra.mxu0 0.0
  %376 = vmatprep.subr.mxu0 0.0
  %377 = vmatpush2.msra.mxu0 0.0
  %378 = vmatprep.mubr.f32.mxu0 0.0
  %379 = vmatmul.mubr.f32.gmra.mxu0 %v312
  %v380 = vpop.f32.mrf.mxu0
  %v381 = vadd.f32 0.0, %v380
  %v382 = vpop.f32.mrf.mxu0
  %383 = vdwg.mxu0
  %v384 = vadd.f32 %v311, %v381
  %v385 = vxor.u32 %v384, 2147483648
  %v386 = vmul.f32 %v385, 1.442695
  %v387 = vpow.pop %v386
  %v388 = vadd.f32 %v387, 1.0
  %v389 = vrcp.pop %v388
  %v390 = vmul.f32 1.0, %v389
  %v391 = vadd.f32 %v381, %v283
  %393 = vrot.lane.b32.xlu0 %v391, 64
  %v394 = vpop.permute.xlu0 %393
  %v396 = vmul.f32 %v390, %v394
  %398 = vrot.lane.b32.xlu0 %v396, 64
  %v399 = vpop.permute.xlu0 %398
  %v401 = vadd.f32 %v311, %v399
  %v402 = vtanh.pop %v401
  %v403 = vsub.f32 1.0, %v390
  %405 = vrot.lane.b32.xlu0 %v402, 96
  %v406 = vpop.permute.xlu0 %405
  %v408 = vmul.f32 %v403, %v406
  %v409 = vmul.f32 %v390, %v304
  %v410 = vadd.f32 %v408, %v409
  %412 = vrot.lane.b32.xlu0 %v410, 96
  %v413 = vpop.permute.xlu0 %412
  %s415 = scalar_lea.vmem [#allocation3], 8
  %416 = vst.msk [vmem:[%s415] sm:$0xff] %vm196, %v413
  %s417 = scalar_lea.vmem [#allocation2], 16
  %v418 = vld [vmem:[%s417] sm:$0xff]
  %v419 = vsel %vm196, %v413, 0
  %421 = vmatprep.subr.mxu0 0.0
  %422 = vmatpush1.msra.mxu0 0.0
  %423 = vmatprep.subr.mxu0 0.0
  %424 = vmatpush1.msra.mxu0 0.0
  %425 = vmatprep.subr.mxu0 0.0
  %426 = vmatpush1.msra.mxu0 0.0
  %427 = vmatprep.subr.mxu0 0.0
  %428 = vmatpush1.msra.mxu0 0.0
  %429 = vmatprep.subr.mxu0 0.0
  %430 = vmatpush1.msra.mxu0 0.0
  %431 = vmatprep.subr.mxu0 0.0
  %432 = vmatpush1.msra.mxu0 0.0
  %433 = vmatprep.subr.mxu0 0.0
  %434 = vmatpush1.msra.mxu0 0.0
  %435 = vmatprep.subr.mxu0 0.0
  %436 = vmatpush1.msra.mxu0 0.0
  %437 = vmatprep.subr.mxu0 0.0
  %438 = vmatpush1.msra.mxu0 0.0
  %439 = vmatprep.subr.mxu0 0.0
  %440 = vmatpush1.msra.mxu0 0.0
  %441 = vmatprep.subr.mxu0 0.0
  %442 = vmatpush1.msra.mxu0 0.0
  %443 = vmatprep.subr.mxu0 0.0
  %444 = vmatpush1.msra.mxu0 0.0
  %445 = vmatprep.subr.mxu0 0.0
  %446 = vmatpush1.msra.mxu0 %v193
  %447 = vmatprep.subr.mxu0 0.0
  %448 = vmatpush1.msra.mxu0 %v192
  %449 = vmatprep.subr.mxu0 0.0
  %450 = vmatpush1.msra.mxu0 %v191
  %451 = vmatprep.subr.mxu0 0.0
  %452 = vmatpush1.msra.mxu0 %v190
  %453 = vmatprep.subr.mxu0 0.0
  %454 = vmatpush2.msra.mxu0 0.0
  %455 = vmatprep.subr.mxu0 0.0
  %456 = vmatpush2.msra.mxu0 0.0
  %457 = vmatprep.subr.mxu0 0.0
  %458 = vmatpush2.msra.mxu0 0.0
  %459 = vmatprep.subr.mxu0 0.0
  %460 = vmatpush2.msra.mxu0 0.0
  %461 = vmatprep.subr.mxu0 0.0
  %462 = vmatpush2.msra.mxu0 0.0
  %463 = vmatprep.subr.mxu0 0.0
  %464 = vmatpush2.msra.mxu0 0.0
  %465 = vmatprep.subr.mxu0 0.0
  %466 = vmatpush2.msra.mxu0 0.0
  %467 = vmatprep.subr.mxu0 0.0
  %468 = vmatpush2.msra.mxu0 0.0
  %469 = vmatprep.subr.mxu0 0.0
  %470 = vmatpush2.msra.mxu0 0.0
  %471 = vmatprep.subr.mxu0 0.0
  %472 = vmatpush2.msra.mxu0 0.0
  %473 = vmatprep.subr.mxu0 0.0
  %474 = vmatpush2.msra.mxu0 0.0
  %475 = vmatprep.subr.mxu0 0.0
  %476 = vmatpush2.msra.mxu0 0.0
  %477 = vmatprep.subr.mxu0 0.0
  %478 = vmatpush2.msra.mxu0 0.0
  %479 = vmatprep.subr.mxu0 0.0
  %480 = vmatpush2.msra.mxu0 0.0
  %481 = vmatprep.subr.mxu0 0.0
  %482 = vmatpush2.msra.mxu0 0.0
  %483 = vmatprep.subr.mxu0 0.0
  %484 = vmatpush2.msra.mxu0 0.0
  %485 = vmatprep.mubr.f32.mxu0 0.0
  %486 = vmatmul.mubr.f32.gmra.mxu0 %v419
  %v487 = vpop.f32.mrf.mxu0
  %v488 = vadd.f32 0.0, %v487
  %v489 = vpop.f32.mrf.mxu0
  %490 = vdwg.mxu0
  %v491 = vadd.f32 %v418, %v488
  %v492 = vxor.u32 %v491, 2147483648
  %v493 = vmul.f32 %v492, 1.442695
  %v494 = vpow.pop %v493
  %v495 = vadd.f32 %v494, 1.0
  %v496 = vrcp.pop %v495
  %v497 = vmul.f32 1.0, %v496
  %v498 = vadd.f32 %v488, %v283
  %500 = vrot.lane.b32.xlu0 %v498, 64
  %v501 = vpop.permute.xlu0 %500
  %v503 = vmul.f32 %v497, %v501
  %505 = vrot.lane.b32.xlu0 %v503, 64
  %v506 = vpop.permute.xlu0 %505
  %v508 = vadd.f32 %v418, %v506
  %v509 = vtanh.pop %v508
  %v510 = vsub.f32 1.0, %v497
  %512 = vrot.lane.b32.xlu0 %v509, 96
  %v513 = vpop.permute.xlu0 %512
  %v515 = vmul.f32 %v510, %v513
  %v516 = vmul.f32 %v497, %v410
  %v517 = vadd.f32 %v515, %v516
  %519 = vrot.lane.b32.xlu0 %v517, 96
  %v520 = vpop.permute.xlu0 %519
  %s522 = scalar_lea.vmem [#allocation3], 16
  %523 = vst.msk [vmem:[%s522] sm:$0xff] %vm196, %v520
  %s524 = scalar_lea.vmem [#allocation2], 24
  %v525 = vld [vmem:[%s524] sm:$0xff]
  %v526 = vsel %vm196, %v520, 0
  %528 = vmatprep.subr.mxu0 0.0
  %529 = vmatpush1.msra.mxu0 0.0
  %530 = vmatprep.subr.mxu0 0.0
  %531 = vmatpush1.msra.mxu0 0.0
  %532 = vmatprep.subr.mxu0 0.0
  %533 = vmatpush1.msra.mxu0 0.0
  %534 = vmatprep.subr.mxu0 0.0
  %535 = vmatpush1.msra.mxu0 0.0
  %536 = vmatprep.subr.mxu0 0.0
  %537 = vmatpush1.msra.mxu0 0.0
  %538 = vmatprep.subr.mxu0 0.0
  %539 = vmatpush1.msra.mxu0 0.0
  %540 = vmatprep.subr.mxu0 0.0
  %541 = vmatpush1.msra.mxu0 0.0
  %542 = vmatprep.subr.mxu0 0.0
  %543 = vmatpush1.msra.mxu0 0.0
  %544 = vmatprep.subr.mxu0 0.0
  %545 = vmatpush1.msra.mxu0 0.0
  %546 = vmatprep.subr.mxu0 0.0
  %547 = vmatpush1.msra.mxu0 0.0
  %548 = vmatprep.subr.mxu0 0.0
  %549 = vmatpush1.msra.mxu0 0.0
  %550 = vmatprep.subr.mxu0 0.0
  %551 = vmatpush1.msra.mxu0 0.0
  %552 = vmatprep.subr.mxu0 0.0
  %553 = vmatpush1.msra.mxu0 %v193
  %554 = vmatprep.subr.mxu0 0.0
  %555 = vmatpush1.msra.mxu0 %v192
  %556 = vmatprep.subr.mxu0 0.0
  %557 = vmatpush1.msra.mxu0 %v191
  %558 = vmatprep.subr.mxu0 0.0
  %559 = vmatpush1.msra.mxu0 %v190
  %560 = vmatprep.subr.mxu0 0.0
  %561 = vmatpush2.msra.mxu0 0.0
  %562 = vmatprep.subr.mxu0 0.0
  %563 = vmatpush2.msra.mxu0 0.0
  %564 = vmatprep.subr.mxu0 0.0
  %565 = vmatpush2.msra.mxu0 0.0
  %566 = vmatprep.subr.mxu0 0.0
  %567 = vmatpush2.msra.mxu0 0.0
  %568 = vmatprep.subr.mxu0 0.0
  %569 = vmatpush2.msra.mxu0 0.0
  %570 = vmatprep.subr.mxu0 0.0
  %571 = vmatpush2.msra.mxu0 0.0
  %572 = vmatprep.subr.mxu0 0.0
  %573 = vmatpush2.msra.mxu0 0.0
  %574 = vmatprep.subr.mxu0 0.0
  %575 = vmatpush2.msra.mxu0 0.0
  %576 = vmatprep.subr.mxu0 0.0
  %577 = vmatpush2.msra.mxu0 0.0
  %578 = vmatprep.subr.mxu0 0.0
  %579 = vmatpush2.msra.mxu0 0.0
  %580 = vmatprep.subr.mxu0 0.0
  %581 = vmatpush2.msra.mxu0 0.0
  %582 = vmatprep.subr.mxu0 0.0
  %583 = vmatpush2.msra.mxu0 0.0
  %584 = vmatprep.subr.mxu0 0.0
  %585 = vmatpush2.msra.mxu0 0.0
  %586 = vmatprep.subr.mxu0 0.0
  %587 = vmatpush2.msra.mxu0 0.0
  %588 = vmatprep.subr.mxu0 0.0
  %589 = vmatpush2.msra.mxu0 0.0
  %590 = vmatprep.subr.mxu0 0.0
  %591 = vmatpush2.msra.mxu0 0.0
  %592 = vmatprep.mubr.f32.mxu0 0.0
  %593 = vmatmul.mubr.f32.gmra.mxu0 %v526
  %v594 = vpop.f32.mrf.mxu0
  %v595 = vadd.f32 0.0, %v594
  %v596 = vpop.f32.mrf.mxu0
  %597 = vdwg.mxu0
  %v598 = vadd.f32 %v525, %v595
  %v599 = vxor.u32 %v598, 2147483648
  %v600 = vmul.f32 %v599, 1.442695
  %v601 = vpow.pop %v600
  %v602 = vadd.f32 %v601, 1.0
  %v603 = vrcp.pop %v602
  %v604 = vmul.f32 1.0, %v603
  %v605 = vadd.f32 %v595, %v283
  %607 = vrot.lane.b32.xlu0 %v605, 64
  %v608 = vpop.permute.xlu0 %607
  %v610 = vmul.f32 %v604, %v608
  %612 = vrot.lane.b32.xlu0 %v610, 64
  %v613 = vpop.permute.xlu0 %612
  %v615 = vadd.f32 %v525, %v613
  %v616 = vtanh.pop %v615
  %v617 = vsub.f32 1.0, %v604
  %619 = vrot.lane.b32.xlu0 %v616, 96
  %v620 = vpop.permute.xlu0 %619
  %v622 = vmul.f32 %v617, %v620
  %v623 = vmul.f32 %v604, %v517
  %v624 = vadd.f32 %v622, %v623
  %626 = vrot.lane.b32.xlu0 %v624, 96
  %v627 = vpop.permute.xlu0 %626
  %s629 = scalar_lea.vmem [#allocation3], 24
  %630 = vst.msk [vmem:[%s629] sm:$0xff] %vm196, %v627
  %s631 = scalar_lea.vmem [#allocation2], 32
  %v632 = vld [vmem:[%s631] sm:$0xff]
  %v633 = vsel %vm196, %v627, 0
  %635 = vmatprep.subr.mxu0 0.0
  %636 = vmatpush1.msra.mxu0 0.0
  %637 = vmatprep.subr.mxu0 0.0
  %638 = vmatpush1.msra.mxu0 0.0
  %639 = vmatprep.subr.mxu0 0.0
  %640 = vmatpush1.msra.mxu0 0.0
  %641 = vmatprep.subr.mxu0 0.0
  %642 = vmatpush1.msra.mxu0 0.0
  %643 = vmatprep.subr.mxu0 0.0
  %644 = vmatpush1.msra.mxu0 0.0
  %645 = vmatprep.subr.mxu0 0.0
  %646 = vmatpush1.msra.mxu0 0.0
  %647 = vmatprep.subr.mxu0 0.0
  %648 = vmatpush1.msra.mxu0 0.0
  %649 = vmatprep.subr.mxu0 0.0
  %650 = vmatpush1.msra.mxu0 0.0
  %651 = vmatprep.subr.mxu0 0.0
  %652 = vmatpush1.msra.mxu0 0.0
  %653 = vmatprep.subr.mxu0 0.0
  %654 = vmatpush1.msra.mxu0 0.0
  %655 = vmatprep.subr.mxu0 0.0
  %656 = vmatpush1.msra.mxu0 0.0
  %657 = vmatprep.subr.mxu0 0.0
  %658 = vmatpush1.msra.mxu0 0.0
  %659 = vmatprep.subr.mxu0 0.0
  %660 = vmatpush1.msra.mxu0 %v193
  %661 = vmatprep.subr.mxu0 0.0
  %662 = vmatpush1.msra.mxu0 %v192
  %663 = vmatprep.subr.mxu0 0.0
  %664 = vmatpush1.msra.mxu0 %v191
  %665 = vmatprep.subr.mxu0 0.0
  %666 = vmatpush1.msra.mxu0 %v190
  %667 = vmatprep.subr.mxu0 0.0
  %668 = vmatpush2.msra.mxu0 0.0
  %669 = vmatprep.subr.mxu0 0.0
  %670 = vmatpush2.msra.mxu0 0.0
  %671 = vmatprep.subr.mxu0 0.0
  %672 = vmatpush2.msra.mxu0 0.0
  %673 = vmatprep.subr.mxu0 0.0
  %674 = vmatpush2.msra.mxu0 0.0
  %675 = vmatprep.subr.mxu0 0.0
  %676 = vmatpush2.msra.mxu0 0.0
  %677 = vmatprep.subr.mxu0 0.0
  %678 = vmatpush2.msra.mxu0 0.0
  %679 = vmatprep.subr.mxu0 0.0
  %680 = vmatpush2.msra.mxu0 0.0
  %681 = vmatprep.subr.mxu0 0.0
  %682 = vmatpush2.msra.mxu0 0.0
  %683 = vmatprep.subr.mxu0 0.0
  %684 = vmatpush2.msra.mxu0 0.0
  %685 = vmatprep.subr.mxu0 0.0
  %686 = vmatpush2.msra.mxu0 0.0
  %687 = vmatprep.subr.mxu0 0.0
  %688 = vmatpush2.msra.mxu0 0.0
  %689 = vmatprep.subr.mxu0 0.0
  %690 = vmatpush2.msra.mxu0 0.0
  %691 = vmatprep.subr.mxu0 0.0
  %692 = vmatpush2.msra.mxu0 0.0
  %693 = vmatprep.subr.mxu0 0.0
  %694 = vmatpush2.msra.mxu0 0.0
  %695 = vmatprep.subr.mxu0 0.0
  %696 = vmatpush2.msra.mxu0 0.0
  %697 = vmatprep.subr.mxu0 0.0
  %698 = vmatpush2.msra.mxu0 0.0
  %699 = vmatprep.mubr.f32.mxu0 0.0
  %700 = vmatmul.mubr.f32.gmra.mxu0 %v633
  %v701 = vpop.f32.mrf.mxu0
  %v702 = vadd.f32 0.0, %v701
  %v703 = vpop.f32.mrf.mxu0
  %704 = vdwg.mxu0
  %v705 = vadd.f32 %v632, %v702
  %v706 = vxor.u32 %v705, 2147483648
  %v707 = vmul.f32 %v706, 1.442695
  %v708 = vpow.pop %v707
  %v709 = vadd.f32 %v708, 1.0
  %v710 = vrcp.pop %v709
  %v711 = vmul.f32 1.0, %v710
  %v712 = vadd.f32 %v702, %v283
  %714 = vrot.lane.b32.xlu0 %v712, 64
  %v715 = vpop.permute.xlu0 %714
  %v717 = vmul.f32 %v711, %v715
  %719 = vrot.lane.b32.xlu0 %v717, 64
  %v720 = vpop.permute.xlu0 %719
  %v722 = vadd.f32 %v632, %v720
  %v723 = vtanh.pop %v722
  %v724 = vsub.f32 1.0, %v711
  %726 = vrot.lane.b32.xlu0 %v723, 96
  %v727 = vpop.permute.xlu0 %726
  %v729 = vmul.f32 %v724, %v727
  %v730 = vmul.f32 %v711, %v624
  %v731 = vadd.f32 %v729, %v730
  %733 = vrot.lane.b32.xlu0 %v731, 96
  %v734 = vpop.permute.xlu0 %733
  %s736 = scalar_lea.vmem [#allocation3], 32
  %737 = vst.msk [vmem:[%s736] sm:$0xff] %vm196, %v734
  %s738 = scalar_lea.vmem [#allocation2], 40
  %v739 = vld [vmem:[%s738] sm:$0xff]
  %v740 = vsel %vm196, %v734, 0
  %742 = vmatprep.subr.mxu0 0.0
  %743 = vmatpush1.msra.mxu0 0.0
  %744 = vmatprep.subr.mxu0 0.0
  %745 = vmatpush1.msra.mxu0 0.0
  %746 = vmatprep.subr.mxu0 0.0
  %747 = vmatpush1.msra.mxu0 0.0
  %748 = vmatprep.subr.mxu0 0.0
  %749 = vmatpush1.msra.mxu0 0.0
  %750 = vmatprep.subr.mxu0 0.0
  %751 = vmatpush1.msra.mxu0 0.0
  %752 = vmatprep.subr.mxu0 0.0
  %753 = vmatpush1.msra.mxu0 0.0
  %754 = vmatprep.subr.mxu0 0.0
  %755 = vmatpush1.msra.mxu0 0.0
  %756 = vmatprep.subr.mxu0 0.0
  %757 = vmatpush1.msra.mxu0 0.0
  %758 = vmatprep.subr.mxu0 0.0
  %759 = vmatpush1.msra.mxu0 0.0
  %760 = vmatprep.subr.mxu0 0.0
  %761 = vmatpush1.msra.mxu0 0.0
  %762 = vmatprep.subr.mxu0 0.0
  %763 = vmatpush1.msra.mxu0 0.0
  %764 = vmatprep.subr.mxu0 0.0
  %765 = vmatpush1.msra.mxu0 0.0
  %766 = vmatprep.subr.mxu0 0.0
  %767 = vmatpush1.msra.mxu0 %v193
  %768 = vmatprep.subr.mxu0 0.0
  %769 = vmatpush1.msra.mxu0 %v192
  %770 = vmatprep.subr.mxu0 0.0
  %771 = vmatpush1.msra.mxu0 %v191
  %772 = vmatprep.subr.mxu0 0.0
  %773 = vmatpush1.msra.mxu0 %v190
  %774 = vmatprep.subr.mxu0 0.0
  %775 = vmatpush2.msra.mxu0 0.0
  %776 = vmatprep.subr.mxu0 0.0
  %777 = vmatpush2.msra.mxu0 0.0
  %778 = vmatprep.subr.mxu0 0.0
  %779 = vmatpush2.msra.mxu0 0.0
  %780 = vmatprep.subr.mxu0 0.0
  %781 = vmatpush2.msra.mxu0 0.0
  %782 = vmatprep.subr.mxu0 0.0
  %783 = vmatpush2.msra.mxu0 0.0
  %784 = vmatprep.subr.mxu0 0.0
  %785 = vmatpush2.msra.mxu0 0.0
  %786 = vmatprep.subr.mxu0 0.0
  %787 = vmatpush2.msra.mxu0 0.0
  %788 = vmatprep.subr.mxu0 0.0
  %789 = vmatpush2.msra.mxu0 0.0
  %790 = vmatprep.subr.mxu0 0.0
  %791 = vmatpush2.msra.mxu0 0.0
  %792 = vmatprep.subr.mxu0 0.0
  %793 = vmatpush2.msra.mxu0 0.0
  %794 = vmatprep.subr.mxu0 0.0
  %795 = vmatpush2.msra.mxu0 0.0
  %796 = vmatprep.subr.mxu0 0.0
  %797 = vmatpush2.msra.mxu0 0.0
  %798 = vmatprep.subr.mxu0 0.0
  %799 = vmatpush2.msra.mxu0 0.0
  %800 = vmatprep.subr.mxu0 0.0
  %801 = vmatpush2.msra.mxu0 0.0
  %802 = vmatprep.subr.mxu0 0.0
  %803 = vmatpush2.msra.mxu0 0.0
  %804 = vmatprep.subr.mxu0 0.0
  %805 = vmatpush2.msra.mxu0 0.0
  %806 = vmatprep.mubr.f32.mxu0 0.0
  %807 = vmatmul.mubr.f32.gmra.mxu0 %v740
  %v808 = vpop.f32.mrf.mxu0
  %v809 = vadd.f32 0.0, %v808
  %v810 = vpop.f32.mrf.mxu0
  %811 = vdwg.mxu0
  %v812 = vadd.f32 %v739, %v809
  %v813 = vxor.u32 %v812, 2147483648
  %v814 = vmul.f32 %v813, 1.442695
  %v815 = vpow.pop %v814
  %v816 = vadd.f32 %v815, 1.0
  %v817 = vrcp.pop %v816
  %v818 = vmul.f32 1.0, %v817
  %v819 = vadd.f32 %v809, %v283
  %821 = vrot.lane.b32.xlu0 %v819, 64
  %v822 = vpop.permute.xlu0 %821
  %v824 = vmul.f32 %v818, %v822
  %826 = vrot.lane.b32.xlu0 %v824, 64
  %v827 = vpop.permute.xlu0 %826
  %v829 = vadd.f32 %v739, %v827
  %v830 = vtanh.pop %v829
  %v831 = vsub.f32 1.0, %v818
  %833 = vrot.lane.b32.xlu0 %v830, 96
  %v834 = vpop.permute.xlu0 %833
  %v836 = vmul.f32 %v831, %v834
  %v837 = vmul.f32 %v818, %v731
  %v838 = vadd.f32 %v836, %v837
  %840 = vrot.lane.b32.xlu0 %v838, 96
  %v841 = vpop.permute.xlu0 %840
  %s843 = scalar_lea.vmem [#allocation3], 40
  %844 = vst.msk [vmem:[%s843] sm:$0xff] %vm196, %v841
  %s845 = scalar_lea.vmem [#allocation2], 48
  %v846 = vld [vmem:[%s845] sm:$0xff]
  %v847 = vsel %vm196, %v841, 0
  %849 = vmatprep.subr.mxu0 0.0
  %850 = vmatpush1.msra.mxu0 0.0
  %851 = vmatprep.subr.mxu0 0.0
  %852 = vmatpush1.msra.mxu0 0.0
  %853 = vmatprep.subr.mxu0 0.0
  %854 = vmatpush1.msra.mxu0 0.0
  %855 = vmatprep.subr.mxu0 0.0
  %856 = vmatpush1.msra.mxu0 0.0
  %857 = vmatprep.subr.mxu0 0.0
  %858 = vmatpush1.msra.mxu0 0.0
  %859 = vmatprep.subr.mxu0 0.0
  %860 = vmatpush1.msra.mxu0 0.0
  %861 = vmatprep.subr.mxu0 0.0
  %862 = vmatpush1.msra.mxu0 0.0
  %863 = vmatprep.subr.mxu0 0.0
  %864 = vmatpush1.msra.mxu0 0.0
  %865 = vmatprep.subr.mxu0 0.0
  %866 = vmatpush1.msra.mxu0 0.0
  %867 = vmatprep.subr.mxu0 0.0
  %868 = vmatpush1.msra.mxu0 0.0
  %869 = vmatprep.subr.mxu0 0.0
  %870 = vmatpush1.msra.mxu0 0.0
  %871 = vmatprep.subr.mxu0 0.0
  %872 = vmatpush1.msra.mxu0 0.0
  %873 = vmatprep.subr.mxu0 0.0
  %874 = vmatpush1.msra.mxu0 %v193
  %875 = vmatprep.subr.mxu0 0.0
  %876 = vmatpush1.msra.mxu0 %v192
  %877 = vmatprep.subr.mxu0 0.0
  %878 = vmatpush1.msra.mxu0 %v191
  %879 = vmatprep.subr.mxu0 0.0
  %880 = vmatpush1.msra.mxu0 %v190
  %881 = vmatprep.subr.mxu0 0.0
  %882 = vmatpush2.msra.mxu0 0.0
  %883 = vmatprep.subr.mxu0 0.0
  %884 = vmatpush2.msra.mxu0 0.0
  %885 = vmatprep.subr.mxu0 0.0
  %886 = vmatpush2.msra.mxu0 0.0
  %887 = vmatprep.subr.mxu0 0.0
  %888 = vmatpush2.msra.mxu0 0.0
  %889 = vmatprep.subr.mxu0 0.0
  %890 = vmatpush2.msra.mxu0 0.0
  %891 = vmatprep.subr.mxu0 0.0
  %892 = vmatpush2.msra.mxu0 0.0
  %893 = vmatprep.subr.mxu0 0.0
  %894 = vmatpush2.msra.mxu0 0.0
  %895 = vmatprep.subr.mxu0 0.0
  %896 = vmatpush2.msra.mxu0 0.0
  %897 = vmatprep.subr.mxu0 0.0
  %898 = vmatpush2.msra.mxu0 0.0
  %899 = vmatprep.subr.mxu0 0.0
  %900 = vmatpush2.msra.mxu0 0.0
  %901 = vmatprep.subr.mxu0 0.0
  %902 = vmatpush2.msra.mxu0 0.0
  %903 = vmatprep.subr.mxu0 0.0
  %904 = vmatpush2.msra.mxu0 0.0
  %905 = vmatprep.subr.mxu0 0.0
  %906 = vmatpush2.msra.mxu0 0.0
  %907 = vmatprep.subr.mxu0 0.0
  %908 = vmatpush2.msra.mxu0 0.0
  %909 = vmatprep.subr.mxu0 0.0
  %910 = vmatpush2.msra.mxu0 0.0
  %911 = vmatprep.subr.mxu0 0.0
  %912 = vmatpush2.msra.mxu0 0.0
  %913 = vmatprep.mubr.f32.mxu0 0.0
  %914 = vmatmul.mubr.f32.gmra.mxu0 %v847
  %v915 = vpop.f32.mrf.mxu0
  %v916 = vadd.f32 0.0, %v915
  %v917 = vpop.f32.mrf.mxu0
  %918 = vdwg.mxu0
  %v919 = vadd.f32 %v846, %v916
  %v920 = vxor.u32 %v919, 2147483648
  %v921 = vmul.f32 %v920, 1.442695
  %v922 = vpow.pop %v921
  %v923 = vadd.f32 %v922, 1.0
  %v924 = vrcp.pop %v923
  %v925 = vmul.f32 1.0, %v924
  %v926 = vadd.f32 %v916, %v283
  %928 = vrot.lane.b32.xlu0 %v926, 64
  %v929 = vpop.permute.xlu0 %928
  %v931 = vmul.f32 %v925, %v929
  %933 = vrot.lane.b32.xlu0 %v931, 64
  %v934 = vpop.permute.xlu0 %933
  %v936 = vadd.f32 %v846, %v934
  %v937 = vtanh.pop %v936
  %v938 = vsub.f32 1.0, %v925
  %940 = vrot.lane.b32.xlu0 %v937, 96
  %v941 = vpop.permute.xlu0 %940
  %v943 = vmul.f32 %v938, %v941
  %v944 = vmul.f32 %v925, %v838
  %v945 = vadd.f32 %v943, %v944
  %947 = vrot.lane.b32.xlu0 %v945, 96
  %v948 = vpop.permute.xlu0 %947
  %s950 = scalar_lea.vmem [#allocation3], 48
  %951 = vst.msk [vmem:[%s950] sm:$0xff] %vm196, %v948
  %s952 = scalar_lea.vmem [#allocation2], 56
  %v953 = vld [vmem:[%s952] sm:$0xff]
  %v954 = vsel %vm196, %v948, 0
  %956 = vmatprep.subr.mxu0 0.0
  %957 = vmatpush1.msra.mxu0 0.0
  %958 = vmatprep.subr.mxu0 0.0
  %959 = vmatpush1.msra.mxu0 0.0
  %960 = vmatprep.subr.mxu0 0.0
  %961 = vmatpush1.msra.mxu0 0.0
  %962 = vmatprep.subr.mxu0 0.0
  %963 = vmatpush1.msra.mxu0 0.0
  %964 = vmatprep.subr.mxu0 0.0
  %965 = vmatpush1.msra.mxu0 0.0
  %966 = vmatprep.subr.mxu0 0.0
  %967 = vmatpush1.msra.mxu0 0.0
  %968 = vmatprep.subr.mxu0 0.0
  %969 = vmatpush1.msra.mxu0 0.0
  %970 = vmatprep.subr.mxu0 0.0
  %971 = vmatpush1.msra.mxu0 0.0
  %972 = vmatprep.subr.mxu0 0.0
  %973 = vmatpush1.msra.mxu0 0.0
  %974 = vmatprep.subr.mxu0 0.0
  %975 = vmatpush1.msra.mxu0 0.0
  %976 = vmatprep.subr.mxu0 0.0
  %977 = vmatpush1.msra.mxu0 0.0
  %978 = vmatprep.subr.mxu0 0.0
  %979 = vmatpush1.msra.mxu0 0.0
  %980 = vmatprep.subr.mxu0 0.0
  %981 = vmatpush1.msra.mxu0 %v193
  %982 = vmatprep.subr.mxu0 0.0
  %983 = vmatpush1.msra.mxu0 %v192
  %984 = vmatprep.subr.mxu0 0.0
  %985 = vmatpush1.msra.mxu0 %v191
  %986 = vmatprep.subr.mxu0 0.0
  %987 = vmatpush1.msra.mxu0 %v190
  %988 = vmatprep.subr.mxu0 0.0
  %989 = vmatpush2.msra.mxu0 0.0
  %990 = vmatprep.subr.mxu0 0.0
  %991 = vmatpush2.msra.mxu0 0.0
  %992 = vmatprep.subr.mxu0 0.0
  %993 = vmatpush2.msra.mxu0 0.0
  %994 = vmatprep.subr.mxu0 0.0
  %995 = vmatpush2.msra.mxu0 0.0
  %996 = vmatprep.subr.mxu0 0.0
  %997 = vmatpush2.msra.mxu0 0.0
  %998 = vmatprep.subr.mxu0 0.0
  %999 = vmatpush2.msra.mxu0 0.0
  %1000 = vmatprep.subr.mxu0 0.0
  %1001 = vmatpush2.msra.mxu0 0.0
  %1002 = vmatprep.subr.mxu0 0.0
  %1003 = vmatpush2.msra.mxu0 0.0
  %1004 = vmatprep.subr.mxu0 0.0
  %1005 = vmatpush2.msra.mxu0 0.0
  %1006 = vmatprep.subr.mxu0 0.0
  %1007 = vmatpush2.msra.mxu0 0.0
  %1008 = vmatprep.subr.mxu0 0.0
  %1009 = vmatpush2.msra.mxu0 0.0
  %1010 = vmatprep.subr.mxu0 0.0
  %1011 = vmatpush2.msra.mxu0 0.0
  %1012 = vmatprep.subr.mxu0 0.0
  %1013 = vmatpush2.msra.mxu0 0.0
  %1014 = vmatprep.subr.mxu0 0.0
  %1015 = vmatpush2.msra.mxu0 0.0
  %1016 = vmatprep.subr.mxu0 0.0
  %1017 = vmatpush2.msra.mxu0 0.0
  %1018 = vmatprep.subr.mxu0 0.0
  %1019 = vmatpush2.msra.mxu0 0.0
  %1020 = vmatprep.mubr.f32.mxu0 0.0
  %1021 = vmatmul.mubr.f32.gmra.mxu0 %v954
  %v1022 = vpop.f32.mrf.mxu0
  %v1023 = vadd.f32 0.0, %v1022
  %v1024 = vpop.f32.mrf.mxu0
  %1025 = vdwg.mxu0
  %v1026 = vadd.f32 %v953, %v1023
  %v1027 = vxor.u32 %v1026, 2147483648
  %v1028 = vmul.f32 %v1027, 1.442695
  %v1029 = vpow.pop %v1028
  %v1030 = vadd.f32 %v1029, 1.0
  %v1031 = vrcp.pop %v1030
  %v1032 = vmul.f32 1.0, %v1031
  %v1033 = vadd.f32 %v1023, %v283
  %1035 = vrot.lane.b32.xlu0 %v1033, 64
  %v1036 = vpop.permute.xlu0 %1035
  %v1038 = vmul.f32 %v1032, %v1036
  %1040 = vrot.lane.b32.xlu0 %v1038, 64
  %v1041 = vpop.permute.xlu0 %1040
  %v1043 = vadd.f32 %v953, %v1041
  %v1044 = vtanh.pop %v1043
  %v1045 = vsub.f32 1.0, %v1032
  %1047 = vrot.lane.b32.xlu0 %v1044, 96
  %v1048 = vpop.permute.xlu0 %1047
  %v1050 = vmul.f32 %v1045, %v1048
  %v1051 = vmul.f32 %v1032, %v945
  %v1052 = vadd.f32 %v1050, %v1051
  %1054 = vrot.lane.b32.xlu0 %v1052, 96
  %v1055 = vpop.permute.xlu0 %1054
  %s1057 = scalar_lea.vmem [#allocation3], 56
  %1058 = vst.msk [vmem:[%s1057] sm:$0xff] %vm196, %v1055
  %v1059 = vld [vmem:[#allocation3] sm:$0xff]
  %v1060 = vld [vmem:[#allocation3 + $0x8] sm:$0xff]
  %v1061 = vld [vmem:[#allocation3 + $0x10] sm:$0xff]
  %v1062 = vld [vmem:[#allocation3 + $0x18] sm:$0xff]
  %v1063 = vld [vmem:[#allocation3 + $0x20] sm:$0xff]
  %v1064 = vld [vmem:[#allocation3 + $0x28] sm:$0xff]
  %v1065 = vld [vmem:[#allocation3 + $0x30] sm:$0xff]
  %v1066 = vld [vmem:[#allocation3 + $0x38] sm:$0xff]
  %v1067 = vld [vmem:[%s5] sm:$0xff]
  %v1068 = vld [vmem:[%s5 + $0x8] sm:$0xff]
  %v1069 = vld [vmem:[%s5 + $0x10] sm:$0xff]
  %v1070 = vld [vmem:[%s5 + $0x18] sm:$0xff]
  %v1071 = vld [vmem:[%s6] sm:$0x1]
  %v1073 = vlaneseq
  %v1074 = vshrl.u32 %v1073, 7
  %v1075 = vsub.s32 0, %v1074
  %v1076 = vrot.slane %v1071, %v1075
  %v1079 = vsel %vm196, %v1059, 0
  %v1082 = vsel %vm196, %v1060, 0
  %v1085 = vsel %vm196, %v1061, 0
  %v1088 = vsel %vm196, %v1062, 0
  %v1091 = vsel %vm196, %v1063, 0
  %v1094 = vsel %vm196, %v1064, 0
  %v1097 = vsel %vm196, %v1065, 0
  %v1100 = vsel %vm196, %v1066, 0
  %1102 = vmatprep.subr.mxu0 0.0
  %1103 = vmatpush1.msra.mxu0 0.0
  %1104 = vmatprep.subr.mxu0 0.0
  %1105 = vmatpush1.msra.mxu0 0.0
  %1106 = vmatprep.subr.mxu0 0.0
  %1107 = vmatpush1.msra.mxu0 0.0
  %1108 = vmatprep.subr.mxu0 0.0
  %1109 = vmatpush1.msra.mxu0 0.0
  %1110 = vmatprep.subr.mxu0 0.0
  %1111 = vmatpush1.msra.mxu0 0.0
  %1112 = vmatprep.subr.mxu0 0.0
  %1113 = vmatpush1.msra.mxu0 0.0
  %1114 = vmatprep.subr.mxu0 0.0
  %1115 = vmatpush1.msra.mxu0 0.0
  %1116 = vmatprep.subr.mxu0 0.0
  %1117 = vmatpush1.msra.mxu0 0.0
  %1118 = vmatprep.subr.mxu0 0.0
  %1119 = vmatpush1.msra.mxu0 0.0
  %1120 = vmatprep.subr.mxu0 0.0
  %1121 = vmatpush1.msra.mxu0 0.0
  %1122 = vmatprep.subr.mxu0 0.0
  %1123 = vmatpush1.msra.mxu0 0.0
  %1124 = vmatprep.subr.mxu0 0.0
  %1125 = vmatpush1.msra.mxu0 0.0
  %1126 = vmatprep.subr.mxu0 0.0
  %1127 = vmatpush1.msra.mxu0 %v1070
  %1128 = vmatprep.subr.mxu0 0.0
  %1129 = vmatpush1.msra.mxu0 %v1069
  %1130 = vmatprep.subr.mxu0 0.0
  %1131 = vmatpush1.msra.mxu0 %v1068
  %1132 = vmatprep.subr.mxu0 0.0
  %1133 = vmatpush1.msra.mxu0 %v1067
  %1134 = vmatprep.subr.mxu0 0.0
  %1135 = vmatpush2.msra.mxu0 0.0
  %1136 = vmatprep.subr.mxu0 0.0
  %1137 = vmatpush2.msra.mxu0 0.0
  %1138 = vmatprep.subr.mxu0 0.0
  %1139 = vmatpush2.msra.mxu0 0.0
  %1140 = vmatprep.subr.mxu0 0.0
  %1141 = vmatpush2.msra.mxu0 0.0
  %1142 = vmatprep.subr.mxu0 0.0
  %1143 = vmatpush2.msra.mxu0 0.0
  %1144 = vmatprep.subr.mxu0 0.0
  %1145 = vmatpush2.msra.mxu0 0.0
  %1146 = vmatprep.subr.mxu0 0.0
  %1147 = vmatpush2.msra.mxu0 0.0
  %1148 = vmatprep.subr.mxu0 0.0
  %1149 = vmatpush2.msra.mxu0 0.0
  %1150 = vmatprep.subr.mxu0 0.0
  %1151 = vmatpush2.msra.mxu0 0.0
  %1152 = vmatprep.subr.mxu0 0.0
  %1153 = vmatpush2.msra.mxu0 0.0
  %1154 = vmatprep.subr.mxu0 0.0
  %1155 = vmatpush2.msra.mxu0 0.0
  %1156 = vmatprep.subr.mxu0 0.0
  %1157 = vmatpush2.msra.mxu0 0.0
  %1158 = vmatprep.subr.mxu0 0.0
  %1159 = vmatpush2.msra.mxu0 0.0
  %1160 = vmatprep.subr.mxu0 0.0
  %1161 = vmatpush2.msra.mxu0 0.0
  %1162 = vmatprep.subr.mxu0 0.0
  %1163 = vmatpush2.msra.mxu0 0.0
  %1164 = vmatprep.subr.mxu0 0.0
  %1165 = vmatpush2.msra.mxu0 0.0
  %1166 = vmatprep.mubr.f32.mxu0 0.0
  %1167 = vmatmul.mubr.f32.gmra.mxu0 %v1079
  %v1168 = vpop.f32.mrf.mxu0
  %v1169 = vadd.f32 %v1076, %v1168
  %v1170 = vpop.f32.mrf.mxu0
  %1171 = vmatprep.mubr.f32.mxu0 0.0
  %1172 = vmatmul.mubr.f32.gmra.mxu0 %v1082
  %v1173 = vpop.f32.mrf.mxu0
  %v1174 = vadd.f32 %v1076, %v1173
  %v1175 = vpop.f32.mrf.mxu0
  %1176 = vmatprep.mubr.f32.mxu0 0.0
  %1177 = vmatmul.mubr.f32.gmra.mxu0 %v1085
  %v1178 = vpop.f32.mrf.mxu0
  %v1179 = vadd.f32 %v1076, %v1178
  %v1180 = vpop.f32.mrf.mxu0
  %1181 = vmatprep.mubr.f32.mxu0 0.0
  %1182 = vmatmul.mubr.f32.gmra.mxu0 %v1088
  %v1183 = vpop.f32.mrf.mxu0
  %v1184 = vadd.f32 %v1076, %v1183
  %v1185 = vpop.f32.mrf.mxu0
  %1186 = vmatprep.mubr.f32.mxu0 0.0
  %1187 = vmatmul.mubr.f32.gmra.mxu0 %v1091
  %v1188 = vpop.f32.mrf.mxu0
  %v1189 = vadd.f32 %v1076, %v1188
  %v1190 = vpop.f32.mrf.mxu0
  %1191 = vmatprep.mubr.f32.mxu0 0.0
  %1192 = vmatmul.mubr.f32.gmra.mxu0 %v1094
  %v1193 = vpop.f32.mrf.mxu0
  %v1194 = vadd.f32 %v1076, %v1193
  %v1195 = vpop.f32.mrf.mxu0
  %1196 = vmatprep.mubr.f32.mxu0 0.0
  %1197 = vmatmul.mubr.f32.gmra.mxu0 %v1097
  %v1198 = vpop.f32.mrf.mxu0
  %v1199 = vadd.f32 %v1076, %v1198
  %v1200 = vpop.f32.mrf.mxu0
  %1201 = vmatprep.mubr.f32.mxu0 0.0
  %1202 = vmatmul.mubr.f32.gmra.mxu0 %v1100
  %v1203 = vpop.f32.mrf.mxu0
  %v1204 = vadd.f32 %v1076, %v1203
  %v1205 = vpop.f32.mrf.mxu0
  %1206 = vdwg.mxu0
  %v1207 = vmax.f32 %v1169, 0.0
  %v1208 = vmax.f32 %v1174, 0.0
  %v1209 = vmax.f32 %v1179, 0.0
  %v1210 = vmax.f32 %v1184, 0.0
  %v1211 = vmax.f32 %v1189, 0.0
  %v1212 = vmax.f32 %v1194, 0.0
  %v1213 = vmax.f32 %v1199, 0.0
  %v1214 = vmax.f32 %v1204, 0.0
  %v1215 = vld [vmem:[%s7] sm:$0x1]
  %v1217 = vlaneseq
  %v1218 = vshrl.u32 %v1217, 7
  %v1219 = vsub.s32 0, %v1218
  %v1220 = vrot.slane %v1215, %v1219
  %v1222 = vmul.f32 %v1207, %v1220
  %v1223 = vmul.f32 %v1208, %v1220
  %v1224 = vmul.f32 %v1209, %v1220
  %v1225 = vmul.f32 %v1210, %v1220
  %v1226 = vmul.f32 %v1211, %v1220
  %v1227 = vmul.f32 %v1212, %v1220
  %v1228 = vmul.f32 %v1213, %v1220
  %v1229 = vmul.f32 %v1214, %v1220
  %v1230 = vsel %vm196, %v1222, 0.0
  %1231 = vadd.xlane.f32.xlu0 %v1230
  %v1232 = vpop.xlane.xlu0 %1231
  %v1233 = vsel %vm196, %v1223, 0.0
  %1234 = vadd.xlane.f32.xlu0 %v1233
  %v1235 = vpop.xlane.xlu0 %1234
  %v1236 = vsel %vm196, %v1224, 0.0
  %1237 = vadd.xlane.f32.xlu0 %v1236
  %v1238 = vpop.xlane.xlu0 %1237
  %v1239 = vsel %vm196, %v1225, 0.0
  %1240 = vadd.xlane.f32.xlu0 %v1239
  %v1241 = vpop.xlane.xlu0 %1240
  %v1242 = vsel %vm196, %v1226, 0.0
  %1243 = vadd.xlane.f32.xlu0 %v1242
  %v1244 = vpop.xlane.xlu0 %1243
  %v1245 = vsel %vm196, %v1227, 0.0
  %1246 = vadd.xlane.f32.xlu0 %v1245
  %v1247 = vpop.xlane.xlu0 %1246
  %v1248 = vsel %vm196, %v1228, 0.0
  %1249 = vadd.xlane.f32.xlu0 %v1248
  %v1250 = vpop.xlane.xlu0 %1249
  %v1251 = vsel %vm196, %v1229, 0.0
  %1252 = vadd.xlane.f32.xlu0 %v1251
  %v1253 = vpop.xlane.xlu0 %1252
  %v1254 = vld [vmem:[#allocation4] sm:$0x1]
  %v1256 = vlaneseq
  %v1257 = vshrl.u32 %v1256, 7
  %v1258 = vsub.s32 0, %v1257
  %v1259 = vrot.slane %v1254, %v1258
  %v1261 = vadd.f32 %v1232, %v1259
  %v1262 = vadd.f32 %v1235, %v1259
  %v1263 = vadd.f32 %v1238, %v1259
  %v1264 = vadd.f32 %v1241, %v1259
  %v1265 = vadd.f32 %v1244, %v1259
  %v1266 = vadd.f32 %v1247, %v1259
  %v1267 = vadd.f32 %v1250, %v1259
  %v1268 = vadd.f32 %v1253, %v1259
  %vm1269 = vcmask 7168
  %1270 = vst.msk [vmem:[%s9] sm:$0xff] %vm1269, %v1261
  %1271 = vst.msk [vmem:[%s9 + $0x8] sm:$0xff] %vm1269, %v1262
  %1272 = vst.msk [vmem:[%s9 + $0x10] sm:$0xff] %vm1269, %v1263
  %1273 = vst.msk [vmem:[%s9 + $0x18] sm:$0xff] %vm1269, %v1264
  %1274 = vst.msk [vmem:[%s9 + $0x20] sm:$0xff] %vm1269, %v1265
  %1275 = vst.msk [vmem:[%s9 + $0x28] sm:$0xff] %vm1269, %v1266
  %1276 = vst.msk [vmem:[%s9 + $0x30] sm:$0xff] %vm1269, %v1267
  %1277 = vst.msk [vmem:[%s9 + $0x38] sm:$0xff] %vm1269, %v1268
  // Predicated region
  $region38: #{tpu_custom_call.1} parent=0 // pred_check
    _
  $region39: #{tpu_custom_call.1} parent=0 // pred_check_branch
    %1279 = sbr.rel (0) target = $region41
  $region40: #{tpu_custom_call.1} parent=0 // pred_region
    _
  $region41: #{tpu_custom_call.1} parent=0 // pred_fallthru
    _
  // Predicated region
  $region42: #{tpu_custom_call.1} parent=0 // pred_check
    _
  $region43: #{tpu_custom_call.1} parent=0 // pred_check_branch
    %1281 = sbr.rel (0) target = $region45
  $region44: #{tpu_custom_call.1} parent=0 // pred_region
    _
  $region45: #{tpu_custom_call.1} parent=0 // pred_fallthru
    _

</llo_original>
